<compile_context>
chip_gen: v7x
topology: tpu7x:2x2x1
jax: 0.10.0
libtpu: 0.0.40
codegen_flags: <defaults>
</compile_context>

<pallas_src>
import functools
import math

import jax
import jax.numpy as jnp
from jax.experimental import pallas as pl
from jax.experimental.pallas import tpu as pltpu


def _conv_gn_relu_kernel(x_ref, w_ref, beta_ref, a2_ref, atg2_ref, p_ref, pt_ref, o_ref,
                         *, C_out, G, eps, act):
    # x_ref:    (K*C_in, NB*L)   im2col'd activations for NB samples (lane = n*L + l)
    # w_ref:    (C_out, K*C_in)  fused conv weight
    # beta_ref: (C_out, 1)
    # a2_ref:   (2G, 2C)   block-diag group one-hot, pre-scaled by 1/(Cg*L)
    # atg2_ref: (2C, 2G)   block-diag channel<-group broadcast, pre-scaled by gamma[c]
    # p_ref:    (NB*L, NB) lane -> sample one-hot ;  pt_ref: (NB, NB*L) its transpose
    # o_ref:    (C_out, NB*L)   lane-dense output slab
    f32 = jnp.float32

    # ---- Conv1d (bias=False, stride=1): one MXU matmul --------------------------------
    acc = jnp.dot(w_ref[...], x_ref[...], preferred_element_type=f32)        # (C, NBL)

    # ---- GroupNorm (per sample, per channel group) -------------------------------------
    # Per-channel, per-sample sum and sum-of-squares (lane -> sample reduction on MXU).
    P = p_ref[...]
    sums = jnp.concatenate(
        [jnp.dot(acc, P, preferred_element_type=f32),
         jnp.dot(acc * acc, P, preferred_element_type=f32)], axis=0)          # (2C, NB)

    # Channel -> group reduction; a2 already carries the 1/(Cg*L) normalization, so this
    # directly yields per-group E[x] (rows :G) and E[x^2] (rows G:).
    gstats = jnp.dot(a2_ref[...], sums, preferred_element_type=f32)           # (2G, NB)
    gmean = gstats[:G]
    # One-pass variance; clamp at 0 to guard against cancellation before adding eps.
    gvar = jnp.maximum(gstats[G:] - gmean * gmean, 0.0)
    ginv = jax.lax.rsqrt(gvar + eps)
    gms = gmean * ginv

    # Group -> channel broadcast with gamma folded in:
    #   chan[:C] = gamma * ginv_bc ,  chan[C:] = gamma * (gmean*ginv)_bc
    chan = jnp.dot(atg2_ref[...], jnp.concatenate([ginv, gms], axis=0),
                   preferred_element_type=f32)                                # (2C, NB)
    scale = chan[:C_out]
    shift = beta_ref[...] - chan[C_out:]

    # Broadcast per-sample scale/shift across each sample's L lanes, then one FMA.
    sb = jnp.dot(jnp.concatenate([scale, shift], axis=0), pt_ref[...],
                 preferred_element_type=f32)                                  # (2C, NBL)
    y = acc * sb[:C_out] + sb[C_out:]
    if act:
        y = jnp.maximum(y, 0.0)
    o_ref[...] = y.astype(o_ref.dtype)


def conv1d_gn_relu(x, w, gamma, beta, *, ng=32, act=True, eps=1e-5):
    """LaneGCN Conv1d block forward.  x: (N, C_in, L); w: (C_out, C_in, K); gamma/beta: (C_out,)."""
    N, C_in, L = x.shape
    C_out, _, K = w.shape
    assert K % 2 == 1, "only odd kernel sizes supported (module default k=3)"
    # TODO(synk): stride != 1 and norm='BN'/'SyncBN' paths of the module are not implemented
    # (module defaults are stride=1, norm='GN').
    G = math.gcd(ng, C_out)
    Cg = C_out // G
    pad = (K - 1) // 2

    # Samples per block: make the lane width NB*L a multiple of 128; widen while N allows.
    NB = 128 // math.gcd(L, 128)
    while NB * L < 1024 and N >= 2 * NB:
        NB *= 2
    N_pad = pl.cdiv(N, NB) * NB
    NBL = NB * L
    KC = K * C_in
    f32 = jnp.float32

    # --- wrapper-side layout plumbing: zero-pad, im2col, lane-dense slabs ---------------
    x = x.astype(f32)
    x_p = jnp.pad(x, ((0, N_pad - N), (0, 0), (pad, pad)))                    # (N_pad, C_in, L+K-1)
    x2 = jnp.stack([x_p[:, :, k:k + L] for k in range(K)], axis=1)            # (N_pad, K, C_in, L)
    x2 = x2.transpose(1, 2, 0, 3).reshape(KC, N_pad * L)                      # row k*C_in+c, col n*L+l
    w2 = jnp.transpose(w, (0, 2, 1)).reshape(C_out, KC).astype(f32)           # (C_out, K*C_in)
    beta2 = beta.reshape(C_out, 1).astype(f32)

    # --- constant segment matrices, built once (kept resident in VMEM) ------------------
    inv_cnt = 1.0 / float(Cg * L)
    rg = jnp.arange(2 * G)
    rc = jnp.arange(2 * C_out)
    # A2[r, c]   = 1/(Cg*L) iff channel-row c belongs to group-row r (block-diag for x & x^2)
    A2 = (rc[None, :] // Cg == rg[:, None]).astype(f32) * inv_cnt             # (2G, 2C)
    # ATg2[c, r] = gamma[c%C] iff channel-row c belongs to group-row r
    ATg2 = ((rc[:, None] // Cg == rg[None, :]).astype(f32)
            * jnp.tile(gamma.astype(f32), 2)[:, None])                        # (2C, 2G)
    lane = jnp.arange(NBL)
    smp = jnp.arange(NB)
    P = (lane[:, None] // L == smp[None, :]).astype(f32)                      # (NBL, NB)
    PT = jnp.transpose(P)                                                     # (NB, NBL)

    kernel = functools.partial(_conv_gn_relu_kernel, C_out=C_out, G=G,
                               eps=float(eps), act=act)

    out2 = pl.pallas_call(
        kernel,
        out_shape=jax.ShapeDtypeStruct((C_out, N_pad * L), f32),
        grid_spec=pltpu.PrefetchScalarGridSpec(
            num_scalar_prefetch=0,
            grid=(N_pad // NB,),
            in_specs=[
                pl.BlockSpec((KC, NBL), lambda i: (0, i)),
                pl.BlockSpec((C_out, KC), lambda i: (0, 0)),
                pl.BlockSpec((C_out, 1), lambda i: (0, 0)),
                pl.BlockSpec((2 * G, 2 * C_out), lambda i: (0, 0)),
                pl.BlockSpec((2 * C_out, 2 * G), lambda i: (0, 0)),
                pl.BlockSpec((NBL, NB), lambda i: (0, 0)),
                pl.BlockSpec((NB, NBL), lambda i: (0, 0)),
            ],
            out_specs=pl.BlockSpec((C_out, NBL), lambda i: (0, i)),
        ),
        compiler_params=pltpu.CompilerParams(dimension_semantics=("parallel",)),
    )(x2, w2, beta2, A2, ATg2, P, PT)

    # Back to the module's (N, C_out, L) layout; drop batch padding.
    return out2.reshape(C_out, N_pad, L).transpose(1, 0, 2)[:N]


def reference(x, w, gamma, beta, *, ng=32, act=True, eps=1e-5):
    """Pure-JAX reference matching PyTorch Conv1d -> GroupNorm -> ReLU."""
    C_out, _, K = w.shape
    G = math.gcd(ng, C_out)
    pad = (K - 1) // 2
    out = jax.lax.conv_general_dilated(
        x, w, window_strides=(1,), padding=((pad, pad),),
        dimension_numbers=('NCH', 'OIH', 'NCH'))
    N, C, L = out.shape
    o = out.reshape(N, G, (C // G) * L)
    mean = o.mean(axis=2, keepdims=True)
    var = o.var(axis=2, keepdims=True)
    o = (o - mean) / jnp.sqrt(var + eps)
    o = o.reshape(N, C, L) * gamma.reshape(1, C, 1) + beta.reshape(1, C, 1)
    if act:
        o = jnp.maximum(o, 0.0)
    return o


if __name__ == "__main__":
    # Small shapes consistent with the module (NCL conv input).
    N, C_in, C_out, L, K, NG = 10, 16, 64, 16, 3, 32

    key = jax.random.PRNGKey(0)
    k1, k2, k3, k4 = jax.random.split(key, 4)
    x = jax.random.normal(k1, (N, C_in, L), dtype=jnp.float32)
    w = 0.1 * jax.random.normal(k2, (C_out, C_in, K), dtype=jnp.float32)
    gamma = 1.0 + 0.1 * jax.random.normal(k3, (C_out,), dtype=jnp.float32)
    beta = 0.1 * jax.random.normal(k4, (C_out,), dtype=jnp.float32)

    out = jax.block_until_ready(conv1d_gn_relu(x, w, gamma, beta, ng=NG, act=True))
    ref = jax.block_until_ready(reference(x, w, gamma, beta, ng=NG, act=True))

    assert out.shape == (N, C_out, L)
    assert jnp.allclose(out, ref, atol=1e-4, rtol=1e-4), float(jnp.max(jnp.abs(out - ref)))
    print("KERNEL_OK")
</pallas_src>

<mosaic_0001>
module attributes {stable_mosaic.version = 11 : i64} {
  func.func @_conv_gn_relu_kernel(%arg0: i32, %arg1: memref<48x128xf32, #tpu.memory_space<vmem>>, %arg2: memref<64x48xf32, #tpu.memory_space<vmem>>, %arg3: memref<64x1xf32, #tpu.memory_space<vmem>>, %arg4: memref<64x128xf32, #tpu.memory_space<vmem>>, %arg5: memref<128x64xf32, #tpu.memory_space<vmem>>, %arg6: memref<128x8xf32, #tpu.memory_space<vmem>>, %arg7: memref<8x128xf32, #tpu.memory_space<vmem>>, %arg8: memref<64x128xf32, #tpu.memory_space<vmem>>) attributes {dimension_semantics = [#tpu.dimension_semantics<parallel>], iteration_bounds = array<i64: 2>, scalar_prefetch = 0 : i64, scratch_operands = 0 : i64, tpu.core_type = #tpu.core_type<tc>, window_params = [{transform_indices = @transform_0, window_bounds = array<i64: 48, 128>}, {pipeline_mode = #tpu.pipeline_mode<synchronous>, transform_indices = @transform_1, window_bounds = array<i64: 64, 48>}, {pipeline_mode = #tpu.pipeline_mode<synchronous>, transform_indices = @transform_2, window_bounds = array<i64: 64, 1>}, {pipeline_mode = #tpu.pipeline_mode<synchronous>, transform_indices = @transform_3, window_bounds = array<i64: 64, 128>}, {pipeline_mode = #tpu.pipeline_mode<synchronous>, transform_indices = @transform_4, window_bounds = array<i64: 128, 64>}, {pipeline_mode = #tpu.pipeline_mode<synchronous>, transform_indices = @transform_5, window_bounds = array<i64: 128, 8>}, {pipeline_mode = #tpu.pipeline_mode<synchronous>, transform_indices = @transform_6, window_bounds = array<i64: 8, 128>}, {transform_indices = @transform_7, window_bounds = array<i64: 64, 128>}]} {
    %c0 = arith.constant 0 : index
    %c0_0 = arith.constant 0 : index
    %0 = vector.load %arg2[%c0, %c0_0] : memref<64x48xf32, #tpu.memory_space<vmem>>, vector<64x48xf32>
    %c0_1 = arith.constant 0 : index
    %c0_2 = arith.constant 0 : index
    %1 = vector.load %arg1[%c0_1, %c0_2] : memref<48x128xf32, #tpu.memory_space<vmem>>, vector<48x128xf32>
    %cst = arith.constant dense<0.000000e+00> : vector<64x128xf32>
    %2 = tpu.matmul %0, %1, %cst {dimension_numbers = #tpu.dot_dimension_numbers<[1], [0], [0], [1], [0, 0, 1, 1], [], []>} : vector<64x48xf32>, vector<48x128xf32>, vector<64x128xf32> -> vector<64x128xf32>
    %c0_3 = arith.constant 0 : index
    %c0_4 = arith.constant 0 : index
    %3 = vector.load %arg6[%c0_3, %c0_4] : memref<128x8xf32, #tpu.memory_space<vmem>>, vector<128x8xf32>
    %cst_5 = arith.constant dense<0.000000e+00> : vector<64x8xf32>
    %4 = tpu.matmul %2, %3, %cst_5 {dimension_numbers = #tpu.dot_dimension_numbers<[1], [0], [0], [1], [0, 0, 1, 1], [], []>} : vector<64x128xf32>, vector<128x8xf32>, vector<64x8xf32> -> vector<64x8xf32>
    %5 = arith.mulf %2, %2 : vector<64x128xf32>
    %cst_6 = arith.constant dense<0.000000e+00> : vector<64x8xf32>
    %6 = tpu.matmul %5, %3, %cst_6 {dimension_numbers = #tpu.dot_dimension_numbers<[1], [0], [0], [1], [0, 0, 1, 1], [], []>} : vector<64x128xf32>, vector<128x8xf32>, vector<64x8xf32> -> vector<64x8xf32>
    %7 = tpu.concatenate %4, %6 in 0 : vector<64x8xf32>, vector<64x8xf32> -> vector<128x8xf32>
    %c0_7 = arith.constant 0 : index
    %c0_8 = arith.constant 0 : index
    %8 = vector.load %arg4[%c0_7, %c0_8] : memref<64x128xf32, #tpu.memory_space<vmem>>, vector<64x128xf32>
    %cst_9 = arith.constant dense<0.000000e+00> : vector<64x8xf32>
    %9 = tpu.matmul %8, %7, %cst_9 {dimension_numbers = #tpu.dot_dimension_numbers<[1], [0], [0], [1], [0, 0, 1, 1], [], []>} : vector<64x128xf32>, vector<128x8xf32>, vector<64x8xf32> -> vector<64x8xf32>
    %10 = vector.extract_strided_slice %9 {offsets = [0, 0], sizes = [32, 8], strides = [1, 1]} : vector<64x8xf32> to vector<32x8xf32>
    %11 = vector.extract_strided_slice %9 {offsets = [32, 0], sizes = [32, 8], strides = [1, 1]} : vector<64x8xf32> to vector<32x8xf32>
    %12 = arith.mulf %10, %10 : vector<32x8xf32>
    %13 = arith.subf %11, %12 : vector<32x8xf32>
    %cst_10 = arith.constant 0.000000e+00 : f32
    %14 = vector.broadcast %cst_10 : f32 to vector<32x8xf32>
    %15 = arith.maximumf %13, %14 : vector<32x8xf32>
    %cst_11 = arith.constant 9.99999974E-6 : f32
    %16 = vector.broadcast %cst_11 : f32 to vector<32x8xf32>
    %17 = arith.addf %15, %16 : vector<32x8xf32>
    %18 = math.rsqrt %17 : vector<32x8xf32>
    %19 = arith.mulf %10, %18 : vector<32x8xf32>
    %c0_12 = arith.constant 0 : index
    %c0_13 = arith.constant 0 : index
    %20 = vector.load %arg5[%c0_12, %c0_13] : memref<128x64xf32, #tpu.memory_space<vmem>>, vector<128x64xf32>
    %21 = tpu.concatenate %18, %19 in 0 : vector<32x8xf32>, vector<32x8xf32> -> vector<64x8xf32>
    %cst_14 = arith.constant dense<0.000000e+00> : vector<128x8xf32>
    %22 = tpu.matmul %20, %21, %cst_14 {dimension_numbers = #tpu.dot_dimension_numbers<[1], [0], [0], [1], [0, 0, 1, 1], [], []>} : vector<128x64xf32>, vector<64x8xf32>, vector<128x8xf32> -> vector<128x8xf32>
    %23 = vector.extract_strided_slice %22 {offsets = [0, 0], sizes = [64, 8], strides = [1, 1]} : vector<128x8xf32> to vector<64x8xf32>
    %c0_15 = arith.constant 0 : index
    %c0_16 = arith.constant 0 : index
    %24 = vector.load %arg3[%c0_15, %c0_16] : memref<64x1xf32, #tpu.memory_space<vmem>>, vector<64x1xf32>
    %25 = vector.extract_strided_slice %22 {offsets = [64, 0], sizes = [64, 8], strides = [1, 1]} : vector<128x8xf32> to vector<64x8xf32>
    %26 = vector.broadcast %24 : vector<64x1xf32> to vector<64x8xf32>
    %27 = arith.subf %26, %25 : vector<64x8xf32>
    %28 = tpu.concatenate %23, %27 in 0 : vector<64x8xf32>, vector<64x8xf32> -> vector<128x8xf32>
    %c0_17 = arith.constant 0 : index
    %c0_18 = arith.constant 0 : index
    %29 = vector.load %arg7[%c0_17, %c0_18] : memref<8x128xf32, #tpu.memory_space<vmem>>, vector<8x128xf32>
    %cst_19 = arith.constant dense<0.000000e+00> : vector<128x128xf32>
    %30 = tpu.matmul %28, %29, %cst_19 {dimension_numbers = #tpu.dot_dimension_numbers<[1], [0], [0], [1], [0, 0, 1, 1], [], []>} : vector<128x8xf32>, vector<8x128xf32>, vector<128x128xf32> -> vector<128x128xf32>
    %31 = vector.extract_strided_slice %30 {offsets = [0, 0], sizes = [64, 128], strides = [1, 1]} : vector<128x128xf32> to vector<64x128xf32>
    %32 = arith.mulf %2, %31 : vector<64x128xf32>
    %33 = vector.extract_strided_slice %30 {offsets = [64, 0], sizes = [64, 128], strides = [1, 1]} : vector<128x128xf32> to vector<64x128xf32>
    %34 = arith.addf %32, %33 : vector<64x128xf32>
    %cst_20 = arith.constant 0.000000e+00 : f32
    %35 = vector.broadcast %cst_20 : f32 to vector<64x128xf32>
    %36 = arith.maximumf %34, %35 : vector<64x128xf32>
    %c0_21 = arith.constant 0 : index
    %c0_22 = arith.constant 0 : index
    %37 = vector.load %arg8[%c0_21, %c0_22] : memref<64x128xf32, #tpu.memory_space<vmem>>, vector<64x128xf32>
    tpu.vector_store %arg8[%c0_21, %c0_22], %36 {strides = array<i32>} : memref<64x128xf32, #tpu.memory_space<vmem>>, vector<64x128xf32>,
    return
  }
  func.func @transform_0(%arg0: i32) -> (i32, i32) {
    %c0_i32 = arith.constant 0 : i32
    %c0_i32_0 = arith.constant 0 : i32
    return %c0_i32, %arg0 : i32, i32
  }
  func.func @transform_1(%arg0: i32) -> (i32, i32) {
    %c0_i32 = arith.constant 0 : i32
    %c0_i32_0 = arith.constant 0 : i32
    %c0_i32_1 = arith.constant 0 : i32
    return %c0_i32, %c0_i32_0 : i32, i32
  }
  func.func @transform_2(%arg0: i32) -> (i32, i32) {
    %c0_i32 = arith.constant 0 : i32
    %c0_i32_0 = arith.constant 0 : i32
    %c0_i32_1 = arith.constant 0 : i32
    return %c0_i32, %c0_i32_0 : i32, i32
  }
  func.func @transform_3(%arg0: i32) -> (i32, i32) {
    %c0_i32 = arith.constant 0 : i32
    %c0_i32_0 = arith.constant 0 : i32
    %c0_i32_1 = arith.constant 0 : i32
    return %c0_i32, %c0_i32_0 : i32, i32
  }
  func.func @transform_4(%arg0: i32) -> (i32, i32) {
    %c0_i32 = arith.constant 0 : i32
    %c0_i32_0 = arith.constant 0 : i32
    %c0_i32_1 = arith.constant 0 : i32
    return %c0_i32, %c0_i32_0 : i32, i32
  }
  func.func @transform_5(%arg0: i32) -> (i32, i32) {
    %c0_i32 = arith.constant 0 : i32
    %c0_i32_0 = arith.constant 0 : i32
    %c0_i32_1 = arith.constant 0 : i32
    return %c0_i32, %c0_i32_0 : i32, i32
  }
  func.func @transform_6(%arg0: i32) -> (i32, i32) {
    %c0_i32 = arith.constant 0 : i32
    %c0_i32_0 = arith.constant 0 : i32
    %c0_i32_1 = arith.constant 0 : i32
    return %c0_i32, %c0_i32_0 : i32, i32
  }
  func.func @transform_7(%arg0: i32) -> (i32, i32) {
    %c0_i32 = arith.constant 0 : i32
    %c0_i32_0 = arith.constant 0 : i32
    return %c0_i32, %arg0 : i32, i32
  }
}

</mosaic_0001>

<llo_original>
// kernel: tpu_custom_call.1
$region0: #{tpu_custom_call.1}
  #allocation0 [shape = 'u32[]', space=smem, size = 0x4, offset = 0x4, fixed_abs, tag = 'smem constant byte address 0x4 - core index']
  #allocation1 [shape = 'u32[144,128]{1,0:T(1,128)}', space=vmem, size = 0x12000, scoped, tag = 'internal scratch']
  %s0 = inlined_call_operand.vmem [shape: f32[48,256], index: 0, kind: input, shape index: {}]
  %s1 = inlined_call_operand.vmem [shape: f32[64,48], index: 1, kind: input, shape index: {}]
  %s2 = inlined_call_operand.vmem [shape: f32[64,1], index: 2, kind: input, shape index: {}]
  %s3 = inlined_call_operand.vmem [shape: f32[64,128], index: 3, kind: input, shape index: {}]
  %s4 = inlined_call_operand.vmem [shape: f32[128,64], index: 4, kind: input, shape index: {}]
  %s5 = inlined_call_operand.vmem [shape: f32[128,8], index: 5, kind: input, shape index: {}]
  %s6 = inlined_call_operand.vmem [shape: f32[8,128], index: 6, kind: input, shape index: {}]
  %s7 = inlined_call_operand.hbm [shape: f32[64,256], index: 7, kind: output, shape index: {}]
  %s8 = sld [smem:[#allocation0]]
  $region99: #{tpu_custom_call.1} parent=0
    _
  %s10 = ssub.s32 1, %s8
  %s11 = scalar_select 0, %s10, %s8
  $region1: #{tpu_custom_call.1} parent=0
    #allocation2 [shape = 'u8[49152]{0}', space=vmem, size = 0xc000, scoped, tag = 'input window, operand 0']
    #allocation3 [shape = 'u8[65536]{0}', space=vmem, size = 0x10000, scoped, tag = 'output window, operand 0']
    #allocation4 [shape = 's32[2]{0}', space=sflag, size = 0x8, scoped, tag = 'scoped memory for tpu_custom_call.1']
    %12 = vsyncpa [#allocation4], 0
    %s13 = scalar_lea.sflag [#allocation4], 1
    %14 = vsyncpa %s13, 0
    loop: start=0, step=1, limit=4
    $region2: #{tpu_custom_call.1} parent=1 // loop_pre_header
      _
    $region3: #{tpu_custom_call.1} parent=1 // loop_header
      %s16 = sphi 0, %s20
      %p17 = scmp.ge.s32.totalorder %s16, 4
      %s26 = sphi 0, %s28
      %s29 = sphi 0, %s26
      %s30 = sphi 0, %s29
      %s46 = sphi 0, %s30
      %s50 = sphi 0, %s50
      %s52 = sphi 0, %s50
      %s53 = sphi 0, %s52
      %s67 = sphi 0, %s53
      %s71 = sphi 0, %s71
      %s73 = sphi 0, %s71
      %s74 = sphi 0, %s73
      %s88 = sphi 0, %s74
      %s92 = sphi 0, %s92
      %s94 = sphi 0, %s92
      %s95 = sphi 0, %s94
      %s109 = sphi 0, %s95
      %s113 = sphi 0, %s113
      %s115 = sphi 0, %s113
      %s116 = sphi 0, %s115
      %s130 = sphi 0, %s116
      %s134 = sphi 0, %s134
      %s136 = sphi 0, %s134
      %s137 = sphi 0, %s136
      %s151 = sphi 0, %s137
      %s155 = sphi 0, %s155
      %s157 = sphi 0, %s155
      %s158 = sphi 0, %s157
      %s172 = sphi 0, %s158
      %s178 = sphi 0, %s180
      %s181 = sphi 0, %s178
      %s182 = sphi 0, %s181
      %s198 = sphi 0, %s182
    $region4: #{tpu_custom_call.1} parent=1 // loop_header_branch
      %19 = sbr.rel (%p17) target = $region8
    $region5: #{tpu_custom_call.1} parent=1 // loop_body
      %s21 = ssub.s32 %s16, 1
      %s22 = ssub.s32 %s16, 2
      %s23 = sadd.s32 %s16, 1
      %s24 = ssub.s32 %s16, %s23
      %p25 = scmp.eq.s32.totalorder %s24, 0
      %s27 = sadd.s32 %s26, 1
      %s28 = scalar_select %p25, %s26, %s27
      %p31 = pneg %p25
      %p32 = scmp.eq.s32.totalorder %s16, 1
      %p33 = por %p31, %p32
      %p34 = scmp.ne.s32.totalorder %s26, %s29
      %p35 = scmp.eq.s32.totalorder %s16, 0
      %p36 = por %p34, %p35
      %p37 = scmp.ne.s32.totalorder %s26, %s29
      %p38 = scmp.eq.s32.totalorder %s21, 1
      %p39 = por %p37, %p38
      %p40 = scmp.ne.s32.totalorder %s29, %s30
      %p41 = scmp.eq.s32.totalorder %s21, 0
      %p42 = por %p40, %p41
      %p43 = scmp.ne.s32.totalorder %s29, %s30
      %p44 = scmp.eq.s32.totalorder %s22, 1
      %p45 = por %p43, %p44
      %p47 = scmp.ne.s32.totalorder %s30, %s46
      %p48 = scmp.eq.s32.totalorder %s22, 0
      %p49 = por %p47, %p48
      %s51 = sadd.s32 %s50, 1
      %p54 = scmp.eq.s32.totalorder %s16, 1
      %p55 = scmp.ne.s32.totalorder %s50, %s52
      %p56 = scmp.eq.s32.totalorder %s16, 0
      %p57 = por %p55, %p56
      %p58 = scmp.ne.s32.totalorder %s50, %s52
      %p59 = scmp.eq.s32.totalorder %s21, 1
      %p60 = por %p58, %p59
      %p61 = scmp.ne.s32.totalorder %s52, %s53
      %p62 = scmp.eq.s32.totalorder %s21, 0
      %p63 = por %p61, %p62
      %p64 = scmp.ne.s32.totalorder %s52, %s53
      %p65 = scmp.eq.s32.totalorder %s22, 1
      %p66 = por %p64, %p65
      %p68 = scmp.ne.s32.totalorder %s53, %s67
      %p69 = scmp.eq.s32.totalorder %s22, 0
      %p70 = por %p68, %p69
      %s72 = sadd.s32 %s71, 1
      %p75 = scmp.eq.s32.totalorder %s16, 1
      %p76 = scmp.ne.s32.totalorder %s71, %s73
      %p77 = scmp.eq.s32.totalorder %s16, 0
      %p78 = por %p76, %p77
      %p79 = scmp.ne.s32.totalorder %s71, %s73
      %p80 = scmp.eq.s32.totalorder %s21, 1
      %p81 = por %p79, %p80
      %p82 = scmp.ne.s32.totalorder %s73, %s74
      %p83 = scmp.eq.s32.totalorder %s21, 0
      %p84 = por %p82, %p83
      %p85 = scmp.ne.s32.totalorder %s73, %s74
      %p86 = scmp.eq.s32.totalorder %s22, 1
      %p87 = por %p85, %p86
      %p89 = scmp.ne.s32.totalorder %s74, %s88
      %p90 = scmp.eq.s32.totalorder %s22, 0
      %p91 = por %p89, %p90
      %s93 = sadd.s32 %s92, 1
      %p96 = scmp.eq.s32.totalorder %s16, 1
      %p97 = scmp.ne.s32.totalorder %s92, %s94
      %p98 = scmp.eq.s32.totalorder %s16, 0
      %p99 = por %p97, %p98
      %p100 = scmp.ne.s32.totalorder %s92, %s94
      %p101 = scmp.eq.s32.totalorder %s21, 1
      %p102 = por %p100, %p101
      %p103 = scmp.ne.s32.totalorder %s94, %s95
      %p104 = scmp.eq.s32.totalorder %s21, 0
      %p105 = por %p103, %p104
      %p106 = scmp.ne.s32.totalorder %s94, %s95
      %p107 = scmp.eq.s32.totalorder %s22, 1
      %p108 = por %p106, %p107
      %p110 = scmp.ne.s32.totalorder %s95, %s109
      %p111 = scmp.eq.s32.totalorder %s22, 0
      %p112 = por %p110, %p111
      %s114 = sadd.s32 %s113, 1
      %p117 = scmp.eq.s32.totalorder %s16, 1
      %p118 = scmp.ne.s32.totalorder %s113, %s115
      %p119 = scmp.eq.s32.totalorder %s16, 0
      %p120 = por %p118, %p119
      %p121 = scmp.ne.s32.totalorder %s113, %s115
      %p122 = scmp.eq.s32.totalorder %s21, 1
      %p123 = por %p121, %p122
      %p124 = scmp.ne.s32.totalorder %s115, %s116
      %p125 = scmp.eq.s32.totalorder %s21, 0
      %p126 = por %p124, %p125
      %p127 = scmp.ne.s32.totalorder %s115, %s116
      %p128 = scmp.eq.s32.totalorder %s22, 1
      %p129 = por %p127, %p128
      %p131 = scmp.ne.s32.totalorder %s116, %s130
      %p132 = scmp.eq.s32.totalorder %s22, 0
      %p133 = por %p131, %p132
      %s135 = sadd.s32 %s134, 1
      %p138 = scmp.eq.s32.totalorder %s16, 1
      %p139 = scmp.ne.s32.totalorder %s134, %s136
      %p140 = scmp.eq.s32.totalorder %s16, 0
      %p141 = por %p139, %p140
      %p142 = scmp.ne.s32.totalorder %s134, %s136
      %p143 = scmp.eq.s32.totalorder %s21, 1
      %p144 = por %p142, %p143
      %p145 = scmp.ne.s32.totalorder %s136, %s137
      %p146 = scmp.eq.s32.totalorder %s21, 0
      %p147 = por %p145, %p146
      %p148 = scmp.ne.s32.totalorder %s136, %s137
      %p149 = scmp.eq.s32.totalorder %s22, 1
      %p150 = por %p148, %p149
      %p152 = scmp.ne.s32.totalorder %s137, %s151
      %p153 = scmp.eq.s32.totalorder %s22, 0
      %p154 = por %p152, %p153
      %s156 = sadd.s32 %s155, 1
      %p159 = scmp.eq.s32.totalorder %s16, 1
      %p160 = scmp.ne.s32.totalorder %s155, %s157
      %p161 = scmp.eq.s32.totalorder %s16, 0
      %p162 = por %p160, %p161
      %p163 = scmp.ne.s32.totalorder %s155, %s157
      %p164 = scmp.eq.s32.totalorder %s21, 1
      %p165 = por %p163, %p164
      %p166 = scmp.ne.s32.totalorder %s157, %s158
      %p167 = scmp.eq.s32.totalorder %s21, 0
      %p168 = por %p166, %p167
      %p169 = scmp.ne.s32.totalorder %s157, %s158
      %p170 = scmp.eq.s32.totalorder %s22, 1
      %p171 = por %p169, %p170
      %p173 = scmp.ne.s32.totalorder %s158, %s172
      %p174 = scmp.eq.s32.totalorder %s22, 0
      %p175 = por %p173, %p174
      %s176 = ssub.s32 %s16, %s23
      %p177 = scmp.eq.s32.totalorder %s176, 0
      %s179 = sadd.s32 %s178, 1
      %s180 = scalar_select %p177, %s178, %s179
      %p183 = pneg %p177
      %p184 = scmp.eq.s32.totalorder %s16, 1
      %p185 = por %p183, %p184
      %p186 = scmp.ne.s32.totalorder %s178, %s181
      %p187 = scmp.eq.s32.totalorder %s16, 0
      %p188 = por %p186, %p187
      %p189 = scmp.ne.s32.totalorder %s178, %s181
      %p190 = scmp.eq.s32.totalorder %s21, 1
      %p191 = por %p189, %p190
      %p192 = scmp.ne.s32.totalorder %s181, %s182
      %p193 = scmp.eq.s32.totalorder %s21, 0
      %p194 = por %p192, %p193
      %p195 = scmp.ne.s32.totalorder %s181, %s182
      %p196 = scmp.eq.s32.totalorder %s22, 1
      %p197 = por %p195, %p196
      %p199 = scmp.ne.s32.totalorder %s182, %s198
      %p200 = scmp.eq.s32.totalorder %s22, 0
      %p201 = por %p199, %p200
      %p202 = scmp.le.s32.totalorder 1, %s16
      %p203 = scmp.lt.s32.totalorder %s16, 3
      %p204 = pnand %p202, %p203
      %p205 = pneg %p204
      // Predicated region
      $region9: #{tpu_custom_call.1} parent=5 // pred_check
        _
      $region10: #{tpu_custom_call.1} parent=5 // pred_check_branch
        %207 = sbr.rel (%p204) target = $region12
      $region11: #{tpu_custom_call.1} parent=5 // pred_region
        %s208 = ssub.s32 %s16, 1
        // Predicated region
        $region13: #{tpu_custom_call.1} parent=11 // pred_check
          %p209 = pneg %p63
        $region14: #{tpu_custom_call.1} parent=11 // pred_check_branch
          %211 = sbr.rel (%p209) target = $region16
        $region15: #{tpu_custom_call.1} parent=11 // pred_region
          _
        $region16: #{tpu_custom_call.1} parent=11 // pred_fallthru
          _
        // Predicated region
        $region17: #{tpu_custom_call.1} parent=11 // pred_check
          %p212 = pneg %p84
        $region18: #{tpu_custom_call.1} parent=11 // pred_check_branch
          %214 = sbr.rel (%p212) target = $region20
        $region19: #{tpu_custom_call.1} parent=11 // pred_region
          _
        $region20: #{tpu_custom_call.1} parent=11 // pred_fallthru
          _
        // Predicated region
        $region21: #{tpu_custom_call.1} parent=11 // pred_check
          %p215 = pneg %p105
        $region22: #{tpu_custom_call.1} parent=11 // pred_check_branch
          %217 = sbr.rel (%p215) target = $region24
        $region23: #{tpu_custom_call.1} parent=11 // pred_region
          _
        $region24: #{tpu_custom_call.1} parent=11 // pred_fallthru
          _
        // Predicated region
        $region25: #{tpu_custom_call.1} parent=11 // pred_check
          %p218 = pneg %p126
        $region26: #{tpu_custom_call.1} parent=11 // pred_check_branch
          %220 = sbr.rel (%p218) target = $region28
        $region27: #{tpu_custom_call.1} parent=11 // pred_region
          _
        $region28: #{tpu_custom_call.1} parent=11 // pred_fallthru
          _
        // Predicated region
        $region29: #{tpu_custom_call.1} parent=11 // pred_check
          %p221 = pneg %p147
        $region30: #{tpu_custom_call.1} parent=11 // pred_check_branch
          %223 = sbr.rel (%p221) target = $region32
        $region31: #{tpu_custom_call.1} parent=11 // pred_region
          _
        $region32: #{tpu_custom_call.1} parent=11 // pred_fallthru
          _
        // Predicated region
        $region33: #{tpu_custom_call.1} parent=11 // pred_check
          %p224 = pneg %p168
        $region34: #{tpu_custom_call.1} parent=11 // pred_check_branch
          %226 = sbr.rel (%p224) target = $region36
        $region35: #{tpu_custom_call.1} parent=11 // pred_region
          _
        $region36: #{tpu_custom_call.1} parent=11 // pred_fallthru
          _
      $region12: #{tpu_custom_call.1} parent=5 // pred_fallthru
        _
      %p227 = scmp.lt.s32.totalorder %s16, 2
      // Predicated region
      $region37: #{tpu_custom_call.1} parent=5 // pred_check
        %p228 = pneg %p227
      $region38: #{tpu_custom_call.1} parent=5 // pred_check_branch
        %230 = sbr.rel (%p228) target = $region40
      $region39: #{tpu_custom_call.1} parent=5 // pred_region
        // Predicated region
        $region41: #{tpu_custom_call.1} parent=39 // pred_check
          %p231 = pneg %p36
        $region42: #{tpu_custom_call.1} parent=39 // pred_check_branch
          %233 = sbr.rel (%p231) target = $region44
        $region43: #{tpu_custom_call.1} parent=39 // pred_region
          %s234 = sand.u32 %s26, 1
          %s235 = sand.u32 %s26, 1
          %s236 = smul.addr %s235, 48
          %s237 = scalar_lea.vmem [#allocation2], %s236
          %s238 = smul.addr %s16, 8
          %s239 = scalar_lea.vmem %s0, %s238
          // Predicated region
          $region45: #{tpu_custom_call.1} parent=43 // pred_check
            _
          $region46: #{tpu_custom_call.1} parent=43 // pred_check_branch
            %241 = sbr.rel (0) target = $region48
          $region47: #{tpu_custom_call.1} parent=43 // pred_region
            // Predicated region
            $region49: #{tpu_custom_call.1} parent=47 // pred_check
              _
            $region50: #{tpu_custom_call.1} parent=47 // pred_check_branch
              %243 = sbr.rel (0) target = $region52
            $region51: #{tpu_custom_call.1} parent=47 // pred_region
              // Predicated region
              $region64: #{tpu_custom_call.1} parent=51 // pred_check
                _
              $region65: #{tpu_custom_call.1} parent=51 // pred_check_branch
                %268 = sbr.rel (0) target = $region67
              $region66: #{tpu_custom_call.1} parent=51 // pred_region
                loop: start=0, step=1, limit=1
                $region68: #{tpu_custom_call.1} parent=66 // loop_pre_header
                  _
                $region69: #{tpu_custom_call.1} parent=66 // loop_header
                  %s270 = sphi 0, %s274
                  %p271 = scmp.ge.s32.totalorder %s270, 1
                  %s275 = sphi %s239, %s239
                  %s276 = sphi %s237, %s237
                $region70: #{tpu_custom_call.1} parent=66 // loop_header_branch
                  %273 = sbr.rel (%p271) target = $region74
                $region71: #{tpu_custom_call.1} parent=66 // loop_body
                  %v277 = vld [vmem:[%s275] sm:$0xff]
                  %278 = vst [vmem:[%s276] sm:$0xff] %v277
                  %v279 = vld [vmem:[%s275 + $0x10] sm:$0xff]
                  %280 = vst [vmem:[%s276 + $0x8] sm:$0xff] %v279
                  %v281 = vld [vmem:[%s275 + $0x20] sm:$0xff]
                  %282 = vst [vmem:[%s276 + $0x10] sm:$0xff] %v281
                  %v283 = vld [vmem:[%s275 + $0x30] sm:$0xff]
                  %284 = vst [vmem:[%s276 + $0x18] sm:$0xff] %v283
                  %v285 = vld [vmem:[%s275 + $0x40] sm:$0xff]
                  %286 = vst [vmem:[%s276 + $0x20] sm:$0xff] %v285
                  %v287 = vld [vmem:[%s275 + $0x50] sm:$0xff]
                  %288 = vst [vmem:[%s276 + $0x28] sm:$0xff] %v287
                $region72: #{tpu_custom_call.1} parent=66 // loop_footer
                  %s274 = sadd.s32 1, %s270
                $region73: #{tpu_custom_call.1} parent=66 // loop_footer_branch
                  %269 = sbr.rel target = $region69
                $region74: #{tpu_custom_call.1} parent=66 // loop_exit
                  _
              $region67: #{tpu_custom_call.1} parent=51 // pred_fallthru
                _
              // Predicated region
              $region75: #{tpu_custom_call.1} parent=51 // pred_check
                _
              $region76: #{tpu_custom_call.1} parent=51 // pred_check_branch
                %290 = sbr.rel target = $region78
              $region77: #{tpu_custom_call.1} parent=51 // pred_region
                _
              $region78: #{tpu_custom_call.1} parent=51 // pred_fallthru
                _
            $region52: #{tpu_custom_call.1} parent=47 // pred_fallthru
              _
            // Predicated region
            $region53: #{tpu_custom_call.1} parent=47 // pred_check
              _
            $region54: #{tpu_custom_call.1} parent=47 // pred_check_branch
              %245 = sbr.rel target = $region56
            $region55: #{tpu_custom_call.1} parent=47 // pred_region
              loop: start=0, step=1, limit=1
              $region57: #{tpu_custom_call.1} parent=55 // loop_pre_header
                _
              $region58: #{tpu_custom_call.1} parent=55 // loop_header
                %s248 = sphi 0, %s252
                %p249 = scmp.ge.s32.totalorder %s248, 1
                %s253 = sphi %s239, %s239
                %s254 = sphi %s237, %s237
              $region59: #{tpu_custom_call.1} parent=55 // loop_header_branch
                %251 = sbr.rel (%p249) target = $region63
              $region60: #{tpu_custom_call.1} parent=55 // loop_body
                %v255 = vld [vmem:[%s253] sm:$0xff]
                %256 = vst [vmem:[%s254] sm:$0xff] %v255
                %v257 = vld [vmem:[%s253 + $0x10] sm:$0xff]
                %258 = vst [vmem:[%s254 + $0x8] sm:$0xff] %v257
                %v259 = vld [vmem:[%s253 + $0x20] sm:$0xff]
                %260 = vst [vmem:[%s254 + $0x10] sm:$0xff] %v259
                %v261 = vld [vmem:[%s253 + $0x30] sm:$0xff]
                %262 = vst [vmem:[%s254 + $0x18] sm:$0xff] %v261
                %v263 = vld [vmem:[%s253 + $0x40] sm:$0xff]
                %264 = vst [vmem:[%s254 + $0x20] sm:$0xff] %v263
                %v265 = vld [vmem:[%s253 + $0x50] sm:$0xff]
                %266 = vst [vmem:[%s254 + $0x28] sm:$0xff] %v265
              $region61: #{tpu_custom_call.1} parent=55 // loop_footer
                %s252 = sadd.s32 1, %s248
              $region62: #{tpu_custom_call.1} parent=55 // loop_footer_branch
                %247 = sbr.rel target = $region58
              $region63: #{tpu_custom_call.1} parent=55 // loop_exit
                _
            $region56: #{tpu_custom_call.1} parent=47 // pred_fallthru
              _
          $region48: #{tpu_custom_call.1} parent=43 // pred_fallthru
            _
          %291 = vnop
        $region44: #{tpu_custom_call.1} parent=39 // pred_fallthru
          _
      $region40: #{tpu_custom_call.1} parent=5 // pred_fallthru
        _
      %p292 = scmp.le.s32.totalorder 1, %s16
      %p293 = scmp.lt.s32.totalorder %s16, 3
      %p294 = pnand %p292, %p293
      %p295 = pneg %p294
      // Predicated region
      $region79: #{tpu_custom_call.1} parent=5 // pred_check
        _
      $region80: #{tpu_custom_call.1} parent=5 // pred_check_branch
        %297 = sbr.rel (%p294) target = $region82
      $region81: #{tpu_custom_call.1} parent=5 // pred_region
        %s298 = ssub.s32 %s16, 1
        %s299 = sand.u32 %s29, 1
        %s300 = sand.u32 %s29, 1
        %s301 = smul.addr %s300, 48
        %s302 = scalar_lea.vmem [#allocation2], %s301
        // Predicated region
        $region83: #{tpu_custom_call.1} parent=81 // pred_check
          %p303 = pneg %p42
        $region84: #{tpu_custom_call.1} parent=81 // pred_check_branch
          %305 = sbr.rel (%p303) target = $region86
        $region85: #{tpu_custom_call.1} parent=81 // pred_region
          _
        $region86: #{tpu_custom_call.1} parent=81 // pred_fallthru
          _
        %s306 = sand.u32 %s29, 1
        %s307 = sand.u32 %s29, 1
        %s308 = smul.addr %s307, 48
        %s309 = scalar_lea.vmem [#allocation2], %s308
        %p310 = pneg %p42
        %p311 = pneg %p39
        %p312 = pneg %p63
        %p313 = pneg %p60
        %p314 = pneg %p84
        %p315 = pneg %p81
        %p316 = pneg %p105
        %p317 = pneg %p102
        %p318 = pneg %p126
        %p319 = pneg %p123
        %p320 = pneg %p147
        %p321 = pneg %p144
        %p322 = pneg %p168
        %p323 = pneg %p165
        %p324 = pneg %p194
        %p325 = pneg %p191
        %s326 = sand.u32 %s181, 1
        %s327 = scalar_lea.sflag [#allocation4], %s326
        %s328 = sand.u32 %s181, 1
        %s329 = smul.addr %s328, 64
        %s330 = scalar_lea.vmem [#allocation3], %s329
        %v331 = vld [vmem:[%s1] sm:$0xff]
        %v332 = vld [vmem:[%s1 + $0x8] sm:$0xff]
        %v333 = vld [vmem:[%s1 + $0x10] sm:$0xff]
        %v334 = vld [vmem:[%s1 + $0x18] sm:$0xff]
        %v335 = vld [vmem:[%s1 + $0x20] sm:$0xff]
        %v336 = vld [vmem:[%s1 + $0x28] sm:$0xff]
        %v337 = vld [vmem:[%s1 + $0x30] sm:$0xff]
        %v338 = vld [vmem:[%s1 + $0x38] sm:$0xff]
        %v339 = vld [vmem:[%s302] sm:$0xff]
        %v340 = vld [vmem:[%s302 + $0x8] sm:$0xff]
        %v341 = vld [vmem:[%s302 + $0x10] sm:$0xff]
        %v342 = vld [vmem:[%s302 + $0x18] sm:$0xff]
        %v343 = vld [vmem:[%s302 + $0x20] sm:$0xff]
        %v344 = vld [vmem:[%s302 + $0x28] sm:$0xff]
        %vm345 = vcmask 392192
        %v347 = vsel %vm345, %v331, 0
        %v350 = vsel %vm345, %v332, 0
        %v353 = vsel %vm345, %v333, 0
        %v356 = vsel %vm345, %v334, 0
        %v359 = vsel %vm345, %v335, 0
        %v362 = vsel %vm345, %v336, 0
        %v365 = vsel %vm345, %v337, 0
        %v368 = vsel %vm345, %v338, 0
        %370 = vmatprep.subr.mxu0 0.0
        %371 = vmatpush1.msra.mxu0 %v339
        %372 = vmatprep.subr.mxu0 0.0
        %373 = vmatpush1.msra.mxu0 %v340
        %374 = vmatprep.subr.mxu0 0.0
        %375 = vmatpush1.msra.mxu0 %v341
        %376 = vmatprep.subr.mxu0 0.0
        %377 = vmatpush1.msra.mxu0 %v342
        %378 = vmatprep.subr.mxu0 0.0
        %379 = vmatpush1.msra.mxu0 %v343
        %380 = vmatprep.subr.mxu0 0.0
        %381 = vmatpush1.msra.mxu0 %v344
        %382 = vmatprep.subr.mxu0 0.0
        %383 = vmatpush1.msra.mxu0 0.0
        %384 = vmatprep.subr.mxu0 0.0
        %385 = vmatpush1.msra.mxu0 0.0
        %386 = vmatprep.subr.mxu0 0.0
        %387 = vmatpush1.msra.mxu0 0.0
        %388 = vmatprep.subr.mxu0 0.0
        %389 = vmatpush1.msra.mxu0 0.0
        %390 = vmatprep.subr.mxu0 0.0
        %391 = vmatpush1.msra.mxu0 0.0
        %392 = vmatprep.subr.mxu0 0.0
        %393 = vmatpush1.msra.mxu0 0.0
        %394 = vmatprep.subr.mxu0 0.0
        %395 = vmatpush1.msra.mxu0 0.0
        %396 = vmatprep.subr.mxu0 0.0
        %397 = vmatpush1.msra.mxu0 0.0
        %398 = vmatprep.subr.mxu0 0.0
        %399 = vmatpush1.msra.mxu0 0.0
        %400 = vmatprep.subr.mxu0 0.0
        %401 = vmatpush1.msra.mxu0 0.0
        %402 = vmatprep.subr.mxu0 0.0
        %403 = vmatpush1.msra.mxu0 0.0
        %404 = vmatprep.subr.mxu0 0.0
        %405 = vmatpush1.msra.mxu0 0.0
        %406 = vmatprep.subr.mxu0 0.0
        %407 = vmatpush1.msra.mxu0 0.0
        %408 = vmatprep.subr.mxu0 0.0
        %409 = vmatpush1.msra.mxu0 0.0
        %410 = vmatprep.subr.mxu0 0.0
        %411 = vmatpush1.msra.mxu0 0.0
        %412 = vmatprep.subr.mxu0 0.0
        %413 = vmatpush1.msra.mxu0 0.0
        %414 = vmatprep.subr.mxu0 0.0
        %415 = vmatpush1.msra.mxu0 0.0
        %416 = vmatprep.subr.mxu0 0.0
        %417 = vmatpush1.msra.mxu0 0.0
        %418 = vmatprep.subr.mxu0 0.0
        %419 = vmatpush1.msra.mxu0 0.0
        %420 = vmatprep.subr.mxu0 0.0
        %421 = vmatpush1.msra.mxu0 0.0
        %422 = vmatprep.subr.mxu0 0.0
        %423 = vmatpush1.msra.mxu0 0.0
        %424 = vmatprep.subr.mxu0 0.0
        %425 = vmatpush1.msra.mxu0 0.0
        %426 = vmatprep.subr.mxu0 0.0
        %427 = vmatpush1.msra.mxu0 0.0
        %428 = vmatprep.subr.mxu0 0.0
        %429 = vmatpush1.msra.mxu0 0.0
        %430 = vmatprep.subr.mxu0 0.0
        %431 = vmatpush1.msra.mxu0 0.0
        %432 = vmatprep.subr.mxu0 0.0
        %433 = vmatpush1.msra.mxu0 0.0
        %434 = vmatprep.mubr.f32.mxu0 0.0
        %435 = vmatmul.mubr.f32.gmra.mrb[0].mxu0 %v347
        %v436 = vpop.f32.mrb[0].mxu0
        %v437 = vadd.f32 0.0, %v436
        %v438 = vpop.f32.mrb[0].mxu0
        %439 = vmatprep.mubr.f32.mxu0 0.0
        %440 = vmatmul.mubr.f32.gmra.mrb[0].mxu0 %v350
        %v441 = vpop.f32.mrb[0].mxu0
        %v442 = vadd.f32 0.0, %v441
        %v443 = vpop.f32.mrb[0].mxu0
        %444 = vmatprep.mubr.f32.mxu0 0.0
        %445 = vmatmul.mubr.f32.gmra.mrb[0].mxu0 %v353
        %v446 = vpop.f32.mrb[0].mxu0
        %v447 = vadd.f32 0.0, %v446
        %v448 = vpop.f32.mrb[0].mxu0
        %449 = vmatprep.mubr.f32.mxu0 0.0
        %450 = vmatmul.mubr.f32.gmra.mrb[0].mxu0 %v356
        %v451 = vpop.f32.mrb[0].mxu0
        %v452 = vadd.f32 0.0, %v451
        %v453 = vpop.f32.mrb[0].mxu0
        %454 = vmatprep.mubr.f32.mxu0 0.0
        %455 = vmatmul.mubr.f32.gmra.mrb[0].mxu0 %v359
        %v456 = vpop.f32.mrb[0].mxu0
        %v457 = vadd.f32 0.0, %v456
        %v458 = vpop.f32.mrb[0].mxu0
        %459 = vmatprep.mubr.f32.mxu0 0.0
        %460 = vmatmul.mubr.f32.gmra.mrb[0].mxu0 %v362
        %v461 = vpop.f32.mrb[0].mxu0
        %v462 = vadd.f32 0.0, %v461
        %v463 = vpop.f32.mrb[0].mxu0
        %464 = vmatprep.mubr.f32.mxu0 0.0
        %465 = vmatmul.mubr.f32.gmra.mrb[0].mxu0 %v365
        %v466 = vpop.f32.mrb[0].mxu0
        %v467 = vadd.f32 0.0, %v466
        %v468 = vpop.f32.mrb[0].mxu0
        %469 = vmatprep.mubr.f32.mxu0 0.0
        %470 = vmatmul.mubr.f32.gmra.mrb[0].mxu0 %v368
        %v471 = vpop.f32.mrb[0].mxu0
        %v472 = vadd.f32 0.0, %v471
        %v473 = vpop.f32.mrb[0].mxu0
        %474 = vdwg.mxu0
        %v475 = vld [vmem:[%s5] sm:$0xff]
        %v476 = vld [vmem:[%s5 + $0x8] sm:$0xff]
        %v477 = vld [vmem:[%s5 + $0x10] sm:$0xff]
        %v478 = vld [vmem:[%s5 + $0x18] sm:$0xff]
        %v479 = vld [vmem:[%s5 + $0x20] sm:$0xff]
        %v480 = vld [vmem:[%s5 + $0x28] sm:$0xff]
        %v481 = vld [vmem:[%s5 + $0x30] sm:$0xff]
        %v482 = vld [vmem:[%s5 + $0x38] sm:$0xff]
        %v483 = vld [vmem:[%s5 + $0x40] sm:$0xff]
        %v484 = vld [vmem:[%s5 + $0x48] sm:$0xff]
        %v485 = vld [vmem:[%s5 + $0x50] sm:$0xff]
        %v486 = vld [vmem:[%s5 + $0x58] sm:$0xff]
        %v487 = vld [vmem:[%s5 + $0x60] sm:$0xff]
        %v488 = vld [vmem:[%s5 + $0x68] sm:$0xff]
        %v489 = vld [vmem:[%s5 + $0x70] sm:$0xff]
        %v490 = vld [vmem:[%s5 + $0x78] sm:$0xff]
        %491 = vmatprep.subr.mxu0 0.0
        %492 = vmatpush1.msra.mxu0 %v475
        %493 = vmatprep.subr.mxu0 0.0
        %494 = vmatpush1.msra.mxu0 %v476
        %495 = vmatprep.subr.mxu0 0.0
        %496 = vmatpush1.msra.mxu0 %v477
        %497 = vmatprep.subr.mxu0 0.0
        %498 = vmatpush1.msra.mxu0 %v478
        %499 = vmatprep.subr.mxu0 0.0
        %500 = vmatpush1.msra.mxu0 %v479
        %501 = vmatprep.subr.mxu0 0.0
        %502 = vmatpush1.msra.mxu0 %v480
        %503 = vmatprep.subr.mxu0 0.0
        %504 = vmatpush1.msra.mxu0 %v481
        %505 = vmatprep.subr.mxu0 0.0
        %506 = vmatpush1.msra.mxu0 %v482
        %507 = vmatprep.subr.mxu0 0.0
        %508 = vmatpush1.msra.mxu0 %v483
        %509 = vmatprep.subr.mxu0 0.0
        %510 = vmatpush1.msra.mxu0 %v484
        %511 = vmatprep.subr.mxu0 0.0
        %512 = vmatpush1.msra.mxu0 %v485
        %513 = vmatprep.subr.mxu0 0.0
        %514 = vmatpush1.msra.mxu0 %v486
        %515 = vmatprep.subr.mxu0 0.0
        %516 = vmatpush1.msra.mxu0 %v487
        %517 = vmatprep.subr.mxu0 0.0
        %518 = vmatpush1.msra.mxu0 %v488
        %519 = vmatprep.subr.mxu0 0.0
        %520 = vmatpush1.msra.mxu0 %v489
        %521 = vmatprep.subr.mxu0 0.0
        %522 = vmatpush1.msra.mxu0 %v490
        %523 = vmatprep.subr.mxu0 0.0
        %524 = vmatpush1.msra.mxu0 0.0
        %525 = vmatprep.subr.mxu0 0.0
        %526 = vmatpush1.msra.mxu0 0.0
        %527 = vmatprep.subr.mxu0 0.0
        %528 = vmatpush1.msra.mxu0 0.0
        %529 = vmatprep.subr.mxu0 0.0
        %530 = vmatpush1.msra.mxu0 0.0
        %531 = vmatprep.subr.mxu0 0.0
        %532 = vmatpush1.msra.mxu0 0.0
        %533 = vmatprep.subr.mxu0 0.0
        %534 = vmatpush1.msra.mxu0 0.0
        %535 = vmatprep.subr.mxu0 0.0
        %536 = vmatpush1.msra.mxu0 0.0
        %537 = vmatprep.subr.mxu0 0.0
        %538 = vmatpush1.msra.mxu0 0.0
        %539 = vmatprep.subr.mxu0 0.0
        %540 = vmatpush1.msra.mxu0 0.0
        %541 = vmatprep.subr.mxu0 0.0
        %542 = vmatpush1.msra.mxu0 0.0
        %543 = vmatprep.subr.mxu0 0.0
        %544 = vmatpush1.msra.mxu0 0.0
        %545 = vmatprep.subr.mxu0 0.0
        %546 = vmatpush1.msra.mxu0 0.0
        %547 = vmatprep.subr.mxu0 0.0
        %548 = vmatpush1.msra.mxu0 0.0
        %549 = vmatprep.subr.mxu0 0.0
        %550 = vmatpush1.msra.mxu0 0.0
        %551 = vmatprep.subr.mxu0 0.0
        %552 = vmatpush1.msra.mxu0 0.0
        %553 = vmatprep.subr.mxu0 0.0
        %554 = vmatpush1.msra.mxu0 0.0
        %555 = vmatprep.mubr.f32.mxu0 0.0
        %556 = vmatmul.mubr.f32.gmra.mrb[0].mxu0 %v437
        %v557 = vpop.f32.mrb[0].mxu0
        %v558 = vadd.f32 0.0, %v557
        %v559 = vpop.f32.mrb[0].mxu0
        %560 = vmatprep.mubr.f32.mxu0 0.0
        %561 = vmatmul.mubr.f32.gmra.mrb[0].mxu0 %v442
        %v562 = vpop.f32.mrb[0].mxu0
        %v563 = vadd.f32 0.0, %v562
        %v564 = vpop.f32.mrb[0].mxu0
        %565 = vmatprep.mubr.f32.mxu0 0.0
        %566 = vmatmul.mubr.f32.gmra.mrb[0].mxu0 %v447
        %v567 = vpop.f32.mrb[0].mxu0
        %v568 = vadd.f32 0.0, %v567
        %v569 = vpop.f32.mrb[0].mxu0
        %570 = vmatprep.mubr.f32.mxu0 0.0
        %571 = vmatmul.mubr.f32.gmra.mrb[0].mxu0 %v452
        %v572 = vpop.f32.mrb[0].mxu0
        %v573 = vadd.f32 0.0, %v572
        %v574 = vpop.f32.mrb[0].mxu0
        %575 = vmatprep.mubr.f32.mxu0 0.0
        %576 = vmatmul.mubr.f32.gmra.mrb[0].mxu0 %v457
        %v577 = vpop.f32.mrb[0].mxu0
        %v578 = vadd.f32 0.0, %v577
        %v579 = vpop.f32.mrb[0].mxu0
        %580 = vmatprep.mubr.f32.mxu0 0.0
        %581 = vmatmul.mubr.f32.gmra.mrb[0].mxu0 %v462
        %v582 = vpop.f32.mrb[0].mxu0
        %v583 = vadd.f32 0.0, %v582
        %v584 = vpop.f32.mrb[0].mxu0
        %585 = vmatprep.mubr.f32.mxu0 0.0
        %586 = vmatmul.mubr.f32.gmra.mrb[0].mxu0 %v467
        %v587 = vpop.f32.mrb[0].mxu0
        %v588 = vadd.f32 0.0, %v587
        %v589 = vpop.f32.mrb[0].mxu0
        %590 = vmatprep.mubr.f32.mxu0 0.0
        %591 = vmatmul.mubr.f32.gmra.mrb[0].mxu0 %v472
        %v592 = vpop.f32.mrb[0].mxu0
        %v593 = vadd.f32 0.0, %v592
        %v594 = vpop.f32.mrb[0].mxu0
        %595 = vdwg.mxu0
        %v596 = vmul.f32 %v437, %v437
        %v597 = vmul.f32 %v442, %v442
        %v598 = vmul.f32 %v447, %v447
        %v599 = vmul.f32 %v452, %v452
        %v600 = vmul.f32 %v457, %v457
        %v601 = vmul.f32 %v462, %v462
        %v602 = vmul.f32 %v467, %v467
        %v603 = vmul.f32 %v472, %v472
        %604 = vmatprep.subr.mxu0 0.0
        %605 = vmatpush1.msra.mxu0 %v475
        %606 = vmatprep.subr.mxu0 0.0
        %607 = vmatpush1.msra.mxu0 %v476
        %608 = vmatprep.subr.mxu0 0.0
        %609 = vmatpush1.msra.mxu0 %v477
        %610 = vmatprep.subr.mxu0 0.0
        %611 = vmatpush1.msra.mxu0 %v478
        %612 = vmatprep.subr.mxu0 0.0
        %613 = vmatpush1.msra.mxu0 %v479
        %614 = vmatprep.subr.mxu0 0.0
        %615 = vmatpush1.msra.mxu0 %v480
        %616 = vmatprep.subr.mxu0 0.0
        %617 = vmatpush1.msra.mxu0 %v481
        %618 = vmatprep.subr.mxu0 0.0
        %619 = vmatpush1.msra.mxu0 %v482
        %620 = vmatprep.subr.mxu0 0.0
        %621 = vmatpush1.msra.mxu0 %v483
        %622 = vmatprep.subr.mxu0 0.0
        %623 = vmatpush1.msra.mxu0 %v484
        %624 = vmatprep.subr.mxu0 0.0
        %625 = vmatpush1.msra.mxu0 %v485
        %626 = vmatprep.subr.mxu0 0.0
        %627 = vmatpush1.msra.mxu0 %v486
        %628 = vmatprep.subr.mxu0 0.0
        %629 = vmatpush1.msra.mxu0 %v487
        %630 = vmatprep.subr.mxu0 0.0
        %631 = vmatpush1.msra.mxu0 %v488
        %632 = vmatprep.subr.mxu0 0.0
        %633 = vmatpush1.msra.mxu0 %v489
        %634 = vmatprep.subr.mxu0 0.0
        %635 = vmatpush1.msra.mxu0 %v490
        %636 = vmatprep.subr.mxu0 0.0
        %637 = vmatpush1.msra.mxu0 0.0
        %638 = vmatprep.subr.mxu0 0.0
        %639 = vmatpush1.msra.mxu0 0.0
        %640 = vmatprep.subr.mxu0 0.0
        %641 = vmatpush1.msra.mxu0 0.0
        %642 = vmatprep.subr.mxu0 0.0
        %643 = vmatpush1.msra.mxu0 0.0
        %644 = vmatprep.subr.mxu0 0.0
        %645 = vmatpush1.msra.mxu0 0.0
        %646 = vmatprep.subr.mxu0 0.0
        %647 = vmatpush1.msra.mxu0 0.0
        %648 = vmatprep.subr.mxu0 0.0
        %649 = vmatpush1.msra.mxu0 0.0
        %650 = vmatprep.subr.mxu0 0.0
        %651 = vmatpush1.msra.mxu0 0.0
        %652 = vmatprep.subr.mxu0 0.0
        %653 = vmatpush1.msra.mxu0 0.0
        %654 = vmatprep.subr.mxu0 0.0
        %655 = vmatpush1.msra.mxu0 0.0
        %656 = vmatprep.subr.mxu0 0.0
        %657 = vmatpush1.msra.mxu0 0.0
        %658 = vmatprep.subr.mxu0 0.0
        %659 = vmatpush1.msra.mxu0 0.0
        %660 = vmatprep.subr.mxu0 0.0
        %661 = vmatpush1.msra.mxu0 0.0
        %662 = vmatprep.subr.mxu0 0.0
        %663 = vmatpush1.msra.mxu0 0.0
        %664 = vmatprep.subr.mxu0 0.0
        %665 = vmatpush1.msra.mxu0 0.0
        %666 = vmatprep.subr.mxu0 0.0
        %667 = vmatpush1.msra.mxu0 0.0
        %668 = vmatprep.mubr.f32.mxu0 0.0
        %669 = vmatmul.mubr.f32.gmra.mrb[0].mxu0 %v596
        %v670 = vpop.f32.mrb[0].mxu0
        %v671 = vadd.f32 0.0, %v670
        %v672 = vpop.f32.mrb[0].mxu0
        %673 = vmatprep.mubr.f32.mxu0 0.0
        %674 = vmatmul.mubr.f32.gmra.mrb[0].mxu0 %v597
        %v675 = vpop.f32.mrb[0].mxu0
        %v676 = vadd.f32 0.0, %v675
        %v677 = vpop.f32.mrb[0].mxu0
        %678 = vmatprep.mubr.f32.mxu0 0.0
        %679 = vmatmul.mubr.f32.gmra.mrb[0].mxu0 %v598
        %v680 = vpop.f32.mrb[0].mxu0
        %v681 = vadd.f32 0.0, %v680
        %v682 = vpop.f32.mrb[0].mxu0
        %683 = vmatprep.mubr.f32.mxu0 0.0
        %684 = vmatmul.mubr.f32.gmra.mrb[0].mxu0 %v599
        %v685 = vpop.f32.mrb[0].mxu0
        %v686 = vadd.f32 0.0, %v685
        %v687 = vpop.f32.mrb[0].mxu0
        %688 = vmatprep.mubr.f32.mxu0 0.0
        %689 = vmatmul.mubr.f32.gmra.mrb[0].mxu0 %v600
        %v690 = vpop.f32.mrb[0].mxu0
        %v691 = vadd.f32 0.0, %v690
        %v692 = vpop.f32.mrb[0].mxu0
        %693 = vmatprep.mubr.f32.mxu0 0.0
        %694 = vmatmul.mubr.f32.gmra.mrb[0].mxu0 %v601
        %v695 = vpop.f32.mrb[0].mxu0
        %v696 = vadd.f32 0.0, %v695
        %v697 = vpop.f32.mrb[0].mxu0
        %698 = vmatprep.mubr.f32.mxu0 0.0
        %699 = vmatmul.mubr.f32.gmra.mrb[0].mxu0 %v602
        %v700 = vpop.f32.mrb[0].mxu0
        %v701 = vadd.f32 0.0, %v700
        %v702 = vpop.f32.mrb[0].mxu0
        %703 = vmatprep.mubr.f32.mxu0 0.0
        %704 = vmatmul.mubr.f32.gmra.mrb[0].mxu0 %v603
        %v705 = vpop.f32.mrb[0].mxu0
        %v706 = vadd.f32 0.0, %v705
        %v707 = vpop.f32.mrb[0].mxu0
        %708 = vdwg.mxu0
        %v709 = vld [vmem:[%s3] sm:$0xff]
        %v710 = vld [vmem:[%s3 + $0x8] sm:$0xff]
        %v711 = vld [vmem:[%s3 + $0x10] sm:$0xff]
        %v712 = vld [vmem:[%s3 + $0x18] sm:$0xff]
        %v713 = vld [vmem:[%s3 + $0x20] sm:$0xff]
        %v714 = vld [vmem:[%s3 + $0x28] sm:$0xff]
        %v715 = vld [vmem:[%s3 + $0x30] sm:$0xff]
        %v716 = vld [vmem:[%s3 + $0x38] sm:$0xff]
        %717 = vmatprep.subr.mxu0 0.0
        %718 = vmatpush1.msra.mxu0 %v558
        %719 = vmatprep.subr.mxu0 0.0
        %720 = vmatpush1.msra.mxu0 %v563
        %721 = vmatprep.subr.mxu0 0.0
        %722 = vmatpush1.msra.mxu0 %v568
        %723 = vmatprep.subr.mxu0 0.0
        %724 = vmatpush1.msra.mxu0 %v573
        %725 = vmatprep.subr.mxu0 0.0
        %726 = vmatpush1.msra.mxu0 %v578
        %727 = vmatprep.subr.mxu0 0.0
        %728 = vmatpush1.msra.mxu0 %v583
        %729 = vmatprep.subr.mxu0 0.0
        %730 = vmatpush1.msra.mxu0 %v588
        %731 = vmatprep.subr.mxu0 0.0
        %732 = vmatpush1.msra.mxu0 %v593
        %733 = vmatprep.subr.mxu0 0.0
        %734 = vmatpush1.msra.mxu0 %v671
        %735 = vmatprep.subr.mxu0 0.0
        %736 = vmatpush1.msra.mxu0 %v676
        %737 = vmatprep.subr.mxu0 0.0
        %738 = vmatpush1.msra.mxu0 %v681
        %739 = vmatprep.subr.mxu0 0.0
        %740 = vmatpush1.msra.mxu0 %v686
        %741 = vmatprep.subr.mxu0 0.0
        %742 = vmatpush1.msra.mxu0 %v691
        %743 = vmatprep.subr.mxu0 0.0
        %744 = vmatpush1.msra.mxu0 %v696
        %745 = vmatprep.subr.mxu0 0.0
        %746 = vmatpush1.msra.mxu0 %v701
        %747 = vmatprep.subr.mxu0 0.0
        %748 = vmatpush1.msra.mxu0 %v706
        %749 = vmatprep.subr.mxu0 0.0
        %750 = vmatpush1.msra.mxu0 0.0
        %751 = vmatprep.subr.mxu0 0.0
        %752 = vmatpush1.msra.mxu0 0.0
        %753 = vmatprep.subr.mxu0 0.0
        %754 = vmatpush1.msra.mxu0 0.0
        %755 = vmatprep.subr.mxu0 0.0
        %756 = vmatpush1.msra.mxu0 0.0
        %757 = vmatprep.subr.mxu0 0.0
        %758 = vmatpush1.msra.mxu0 0.0
        %759 = vmatprep.subr.mxu0 0.0
        %760 = vmatpush1.msra.mxu0 0.0
        %761 = vmatprep.subr.mxu0 0.0
        %762 = vmatpush1.msra.mxu0 0.0
        %763 = vmatprep.subr.mxu0 0.0
        %764 = vmatpush1.msra.mxu0 0.0
        %765 = vmatprep.subr.mxu0 0.0
        %766 = vmatpush1.msra.mxu0 0.0
        %767 = vmatprep.subr.mxu0 0.0
        %768 = vmatpush1.msra.mxu0 0.0
        %769 = vmatprep.subr.mxu0 0.0
        %770 = vmatpush1.msra.mxu0 0.0
        %771 = vmatprep.subr.mxu0 0.0
        %772 = vmatpush1.msra.mxu0 0.0
        %773 = vmatprep.subr.mxu0 0.0
        %774 = vmatpush1.msra.mxu0 0.0
        %775 = vmatprep.subr.mxu0 0.0
        %776 = vmatpush1.msra.mxu0 0.0
        %777 = vmatprep.subr.mxu0 0.0
        %778 = vmatpush1.msra.mxu0 0.0
        %779 = vmatprep.subr.mxu0 0.0
        %780 = vmatpush1.msra.mxu0 0.0
        %781 = vmatprep.mubr.f32.mxu0 0.0
        %782 = vmatmul.mubr.f32.gmra.mrb[0].mxu0 %v709
        %v783 = vpop.f32.mrb[0].mxu0
        %v784 = vadd.f32 0.0, %v783
        %v785 = vpop.f32.mrb[0].mxu0
        %786 = vmatprep.mubr.f32.mxu0 0.0
        %787 = vmatmul.mubr.f32.gmra.mrb[0].mxu0 %v710
        %v788 = vpop.f32.mrb[0].mxu0
        %v789 = vadd.f32 0.0, %v788
        %v790 = vpop.f32.mrb[0].mxu0
        %791 = vmatprep.mubr.f32.mxu0 0.0
        %792 = vmatmul.mubr.f32.gmra.mrb[0].mxu0 %v711
        %v793 = vpop.f32.mrb[0].mxu0
        %v794 = vadd.f32 0.0, %v793
        %v795 = vpop.f32.mrb[0].mxu0
        %796 = vmatprep.mubr.f32.mxu0 0.0
        %797 = vmatmul.mubr.f32.gmra.mrb[0].mxu0 %v712
        %v798 = vpop.f32.mrb[0].mxu0
        %v799 = vadd.f32 0.0, %v798
        %v800 = vpop.f32.mrb[0].mxu0
        %801 = vmatprep.mubr.f32.mxu0 0.0
        %802 = vmatmul.mubr.f32.gmra.mrb[0].mxu0 %v713
        %v803 = vpop.f32.mrb[0].mxu0
        %v804 = vadd.f32 0.0, %v803
        %v805 = vpop.f32.mrb[0].mxu0
        %806 = vmatprep.mubr.f32.mxu0 0.0
        %807 = vmatmul.mubr.f32.gmra.mrb[0].mxu0 %v714
        %v808 = vpop.f32.mrb[0].mxu0
        %v809 = vadd.f32 0.0, %v808
        %v810 = vpop.f32.mrb[0].mxu0
        %811 = vmatprep.mubr.f32.mxu0 0.0
        %812 = vmatmul.mubr.f32.gmra.mrb[0].mxu0 %v715
        %v813 = vpop.f32.mrb[0].mxu0
        %v814 = vadd.f32 0.0, %v813
        %v815 = vpop.f32.mrb[0].mxu0
        %816 = vmatprep.mubr.f32.mxu0 0.0
        %817 = vmatmul.mubr.f32.gmra.mrb[0].mxu0 %v716
        %v818 = vpop.f32.mrb[0].mxu0
        %v819 = vadd.f32 0.0, %v818
        %v820 = vpop.f32.mrb[0].mxu0
        %821 = vdwg.mxu0
        %v822 = vmul.f32 %v784, %v784
        %v823 = vmul.f32 %v789, %v789
        %v824 = vmul.f32 %v794, %v794
        %v825 = vmul.f32 %v799, %v799
        %v826 = vsub.f32 %v804, %v822
        %v827 = vsub.f32 %v809, %v823
        %v828 = vsub.f32 %v814, %v824
        %v829 = vsub.f32 %v819, %v825
        %v830 = vmax.f32 %v826, 0.0
        %v831 = vmax.f32 %v827, 0.0
        %v832 = vmax.f32 %v828, 0.0
        %v833 = vmax.f32 %v829, 0.0
        %v834 = vadd.f32 %v830, 1e-05
        %v835 = vadd.f32 %v831, 1e-05
        %v836 = vadd.f32 %v832, 1e-05
        %v837 = vadd.f32 %v833, 1e-05
        %v838 = vrsqrt.pop %v834
        %v839 = vrsqrt.pop %v835
        %v840 = vrsqrt.pop %v836
        %v841 = vrsqrt.pop %v837
        %v842 = vmul.f32 %v784, %v838
        %v843 = vmul.f32 %v789, %v839
        %v844 = vmul.f32 %v794, %v840
        %v845 = vmul.f32 %v799, %v841
        %v846 = vld [vmem:[%s4] sm:$0xff]
        %v847 = vld [vmem:[%s4 + $0x8] sm:$0xff]
        %v848 = vld [vmem:[%s4 + $0x10] sm:$0xff]
        %v849 = vld [vmem:[%s4 + $0x18] sm:$0xff]
        %v850 = vld [vmem:[%s4 + $0x20] sm:$0xff]
        %v851 = vld [vmem:[%s4 + $0x28] sm:$0xff]
        %v852 = vld [vmem:[%s4 + $0x30] sm:$0xff]
        %v853 = vld [vmem:[%s4 + $0x38] sm:$0xff]
        %v854 = vld [vmem:[%s4 + $0x40] sm:$0xff]
        %v855 = vld [vmem:[%s4 + $0x48] sm:$0xff]
        %v856 = vld [vmem:[%s4 + $0x50] sm:$0xff]
        %v857 = vld [vmem:[%s4 + $0x58] sm:$0xff]
        %v858 = vld [vmem:[%s4 + $0x60] sm:$0xff]
        %v859 = vld [vmem:[%s4 + $0x68] sm:$0xff]
        %v860 = vld [vmem:[%s4 + $0x70] sm:$0xff]
        %v861 = vld [vmem:[%s4 + $0x78] sm:$0xff]
        %vm862 = vcmask 523264
        %v864 = vsel %vm862, %v846, 0
        %v867 = vsel %vm862, %v847, 0
        %v870 = vsel %vm862, %v848, 0
        %v873 = vsel %vm862, %v849, 0
        %v876 = vsel %vm862, %v850, 0
        %v879 = vsel %vm862, %v851, 0
        %v882 = vsel %vm862, %v852, 0
        %v885 = vsel %vm862, %v853, 0
        %v888 = vsel %vm862, %v854, 0
        %v891 = vsel %vm862, %v855, 0
        %v894 = vsel %vm862, %v856, 0
        %v897 = vsel %vm862, %v857, 0
        %v900 = vsel %vm862, %v858, 0
        %v903 = vsel %vm862, %v859, 0
        %v906 = vsel %vm862, %v860, 0
        %v909 = vsel %vm862, %v861, 0
        %911 = vmatprep.subr.mxu0 0.0
        %912 = vmatpush1.msra.mxu0 %v838
        %913 = vmatprep.subr.mxu0 0.0
        %914 = vmatpush1.msra.mxu0 %v839
        %915 = vmatprep.subr.mxu0 0.0
        %916 = vmatpush1.msra.mxu0 %v840
        %917 = vmatprep.subr.mxu0 0.0
        %918 = vmatpush1.msra.mxu0 %v841
        %919 = vmatprep.subr.mxu0 0.0
        %920 = vmatpush1.msra.mxu0 %v842
        %921 = vmatprep.subr.mxu0 0.0
        %922 = vmatpush1.msra.mxu0 %v843
        %923 = vmatprep.subr.mxu0 0.0
        %924 = vmatpush1.msra.mxu0 %v844
        %925 = vmatprep.subr.mxu0 0.0
        %926 = vmatpush1.msra.mxu0 %v845
        %927 = vmatprep.subr.mxu0 0.0
        %928 = vmatpush1.msra.mxu0 0.0
        %929 = vmatprep.subr.mxu0 0.0
        %930 = vmatpush1.msra.mxu0 0.0
        %931 = vmatprep.subr.mxu0 0.0
        %932 = vmatpush1.msra.mxu0 0.0
        %933 = vmatprep.subr.mxu0 0.0
        %934 = vmatpush1.msra.mxu0 0.0
        %935 = vmatprep.subr.mxu0 0.0
        %936 = vmatpush1.msra.mxu0 0.0
        %937 = vmatprep.subr.mxu0 0.0
        %938 = vmatpush1.msra.mxu0 0.0
        %939 = vmatprep.subr.mxu0 0.0
        %940 = vmatpush1.msra.mxu0 0.0
        %941 = vmatprep.subr.mxu0 0.0
        %942 = vmatpush1.msra.mxu0 0.0
        %943 = vmatprep.subr.mxu0 0.0
        %944 = vmatpush1.msra.mxu0 0.0
        %945 = vmatprep.subr.mxu0 0.0
        %946 = vmatpush1.msra.mxu0 0.0
        %947 = vmatprep.subr.mxu0 0.0
        %948 = vmatpush1.msra.mxu0 0.0
        %949 = vmatprep.subr.mxu0 0.0
        %950 = vmatpush1.msra.mxu0 0.0
        %951 = vmatprep.subr.mxu0 0.0
        %952 = vmatpush1.msra.mxu0 0.0
        %953 = vmatprep.subr.mxu0 0.0
        %954 = vmatpush1.msra.mxu0 0.0
        %955 = vmatprep.subr.mxu0 0.0
        %956 = vmatpush1.msra.mxu0 0.0
        %957 = vmatprep.subr.mxu0 0.0
        %958 = vmatpush1.msra.mxu0 0.0
        %959 = vmatprep.subr.mxu0 0.0
        %960 = vmatpush1.msra.mxu0 0.0
        %961 = vmatprep.subr.mxu0 0.0
        %962 = vmatpush1.msra.mxu0 0.0
        %963 = vmatprep.subr.mxu0 0.0
        %964 = vmatpush1.msra.mxu0 0.0
        %965 = vmatprep.subr.mxu0 0.0
        %966 = vmatpush1.msra.mxu0 0.0
        %967 = vmatprep.subr.mxu0 0.0
        %968 = vmatpush1.msra.mxu0 0.0
        %969 = vmatprep.subr.mxu0 0.0
        %970 = vmatpush1.msra.mxu0 0.0
        %971 = vmatprep.subr.mxu0 0.0
        %972 = vmatpush1.msra.mxu0 0.0
        %973 = vmatprep.subr.mxu0 0.0
        %974 = vmatpush1.msra.mxu0 0.0
        %975 = vmatprep.mubr.f32.mxu0 0.0
        %976 = vmatmul.mubr.f32.gmra.mrb[0].mxu0 %v864
        %v977 = vpop.f32.mrb[0].mxu0
        %v978 = vadd.f32 0.0, %v977
        %v979 = vpop.f32.mrb[0].mxu0
        %980 = vmatprep.mubr.f32.mxu0 0.0
        %981 = vmatmul.mubr.f32.gmra.mrb[0].mxu0 %v867
        %v982 = vpop.f32.mrb[0].mxu0
        %v983 = vadd.f32 0.0, %v982
        %v984 = vpop.f32.mrb[0].mxu0
        %985 = vmatprep.mubr.f32.mxu0 0.0
        %986 = vmatmul.mubr.f32.gmra.mrb[0].mxu0 %v870
        %v987 = vpop.f32.mrb[0].mxu0
        %v988 = vadd.f32 0.0, %v987
        %v989 = vpop.f32.mrb[0].mxu0
        %990 = vmatprep.mubr.f32.mxu0 0.0
        %991 = vmatmul.mubr.f32.gmra.mrb[0].mxu0 %v873
        %v992 = vpop.f32.mrb[0].mxu0
        %v993 = vadd.f32 0.0, %v992
        %v994 = vpop.f32.mrb[0].mxu0
        %995 = vmatprep.mubr.f32.mxu0 0.0
        %996 = vmatmul.mubr.f32.gmra.mrb[0].mxu0 %v876
        %v997 = vpop.f32.mrb[0].mxu0
        %v998 = vadd.f32 0.0, %v997
        %v999 = vpop.f32.mrb[0].mxu0
        %1000 = vmatprep.mubr.f32.mxu0 0.0
        %1001 = vmatmul.mubr.f32.gmra.mrb[0].mxu0 %v879
        %v1002 = vpop.f32.mrb[0].mxu0
        %v1003 = vadd.f32 0.0, %v1002
        %v1004 = vpop.f32.mrb[0].mxu0
        %1005 = vmatprep.mubr.f32.mxu0 0.0
        %1006 = vmatmul.mubr.f32.gmra.mrb[0].mxu0 %v882
        %v1007 = vpop.f32.mrb[0].mxu0
        %v1008 = vadd.f32 0.0, %v1007
        %v1009 = vpop.f32.mrb[0].mxu0
        %1010 = vmatprep.mubr.f32.mxu0 0.0
        %1011 = vmatmul.mubr.f32.gmra.mrb[0].mxu0 %v885
        %v1012 = vpop.f32.mrb[0].mxu0
        %v1013 = vadd.f32 0.0, %v1012
        %v1014 = vpop.f32.mrb[0].mxu0
        %1015 = vmatprep.mubr.f32.mxu0 0.0
        %1016 = vmatmul.mubr.f32.gmra.mrb[0].mxu0 %v888
        %v1017 = vpop.f32.mrb[0].mxu0
        %v1018 = vadd.f32 0.0, %v1017
        %v1019 = vpop.f32.mrb[0].mxu0
        %1020 = vmatprep.mubr.f32.mxu0 0.0
        %1021 = vmatmul.mubr.f32.gmra.mrb[0].mxu0 %v891
        %v1022 = vpop.f32.mrb[0].mxu0
        %v1023 = vadd.f32 0.0, %v1022
        %v1024 = vpop.f32.mrb[0].mxu0
        %1025 = vmatprep.mubr.f32.mxu0 0.0
        %1026 = vmatmul.mubr.f32.gmra.mrb[0].mxu0 %v894
        %v1027 = vpop.f32.mrb[0].mxu0
        %v1028 = vadd.f32 0.0, %v1027
        %v1029 = vpop.f32.mrb[0].mxu0
        %1030 = vmatprep.mubr.f32.mxu0 0.0
        %1031 = vmatmul.mubr.f32.gmra.mrb[0].mxu0 %v897
        %v1032 = vpop.f32.mrb[0].mxu0
        %v1033 = vadd.f32 0.0, %v1032
        %v1034 = vpop.f32.mrb[0].mxu0
        %1035 = vmatprep.mubr.f32.mxu0 0.0
        %1036 = vmatmul.mubr.f32.gmra.mrb[0].mxu0 %v900
        %v1037 = vpop.f32.mrb[0].mxu0
        %v1038 = vadd.f32 0.0, %v1037
        %v1039 = vpop.f32.mrb[0].mxu0
        %1040 = vmatprep.mubr.f32.mxu0 0.0
        %1041 = vmatmul.mubr.f32.gmra.mrb[0].mxu0 %v903
        %v1042 = vpop.f32.mrb[0].mxu0
        %v1043 = vadd.f32 0.0, %v1042
        %v1044 = vpop.f32.mrb[0].mxu0
        %1045 = vmatprep.mubr.f32.mxu0 0.0
        %1046 = vmatmul.mubr.f32.gmra.mrb[0].mxu0 %v906
        %v1047 = vpop.f32.mrb[0].mxu0
        %v1048 = vadd.f32 0.0, %v1047
        %v1049 = vpop.f32.mrb[0].mxu0
        %1050 = vmatprep.mubr.f32.mxu0 0.0
        %1051 = vmatmul.mubr.f32.gmra.mrb[0].mxu0 %v909
        %v1052 = vpop.f32.mrb[0].mxu0
        %v1053 = vadd.f32 0.0, %v1052
        %v1054 = vpop.f32.mrb[0].mxu0
        %1055 = vdwg.mxu0
        %v1056 = vld [vmem:[%s2] sm:$0xff]
        %v1057 = vld [vmem:[%s2 + $0x8] sm:$0xff]
        %v1058 = vld [vmem:[%s2 + $0x10] sm:$0xff]
        %v1059 = vld [vmem:[%s2 + $0x18] sm:$0xff]
        %v1060 = vld [vmem:[%s2 + $0x20] sm:$0xff]
        %v1061 = vld [vmem:[%s2 + $0x28] sm:$0xff]
        %v1062 = vld [vmem:[%s2 + $0x30] sm:$0xff]
        %v1063 = vld [vmem:[%s2 + $0x38] sm:$0xff]
        %1065 = vset.pattern.permute.xlu0 0
        %1066 = vperm.xlu0 %1065, %v1056
        %v1067 = vpop.permute.xlu0 %1066
        %1070 = vset.pattern.permute.xlu0 0
        %1071 = vperm.xlu0 %1070, %v1057
        %v1072 = vpop.permute.xlu0 %1071
        %1075 = vset.pattern.permute.xlu0 0
        %1076 = vperm.xlu0 %1075, %v1058
        %v1077 = vpop.permute.xlu0 %1076
        %1080 = vset.pattern.permute.xlu0 0
        %1081 = vperm.xlu0 %1080, %v1059
        %v1082 = vpop.permute.xlu0 %1081
        %1085 = vset.pattern.permute.xlu0 0
        %1086 = vperm.xlu0 %1085, %v1060
        %v1087 = vpop.permute.xlu0 %1086
        %1090 = vset.pattern.permute.xlu0 0
        %1091 = vperm.xlu0 %1090, %v1061
        %v1092 = vpop.permute.xlu0 %1091
        %1095 = vset.pattern.permute.xlu0 0
        %1096 = vperm.xlu0 %1095, %v1062
        %v1097 = vpop.permute.xlu0 %1096
        %1100 = vset.pattern.permute.xlu0 0
        %1101 = vperm.xlu0 %1100, %v1063
        %v1102 = vpop.permute.xlu0 %1101
        %v1104 = vsub.f32 %v1067, %v1018
        %v1105 = vsub.f32 %v1072, %v1023
        %v1106 = vsub.f32 %v1077, %v1028
        %v1107 = vsub.f32 %v1082, %v1033
        %v1108 = vsub.f32 %v1087, %v1038
        %v1109 = vsub.f32 %v1092, %v1043
        %v1110 = vsub.f32 %v1097, %v1048
        %v1111 = vsub.f32 %v1102, %v1053
        %v1112 = vld [vmem:[%s6] sm:$0xff]
        %vm1113 = vcmask 64512
        %v1115 = vsel %vm1113, %v978, 0
        %v1118 = vsel %vm1113, %v983, 0
        %v1121 = vsel %vm1113, %v988, 0
        %v1124 = vsel %vm1113, %v993, 0
        %v1127 = vsel %vm1113, %v998, 0
        %v1130 = vsel %vm1113, %v1003, 0
        %v1133 = vsel %vm1113, %v1008, 0
        %v1136 = vsel %vm1113, %v1013, 0
        %v1139 = vsel %vm1113, %v1104, 0
        %v1142 = vsel %vm1113, %v1105, 0
        %v1145 = vsel %vm1113, %v1106, 0
        %v1148 = vsel %vm1113, %v1107, 0
        %v1151 = vsel %vm1113, %v1108, 0
        %v1154 = vsel %vm1113, %v1109, 0
        %v1157 = vsel %vm1113, %v1110, 0
        %v1160 = vsel %vm1113, %v1111, 0
        %1162 = vmatprep.subr.mxu0 0.0
        %1163 = vmatpush1.msra.mxu0 %v1112
        %1164 = vmatprep.subr.mxu0 0.0
        %1165 = vmatpush1.msra.mxu0 0.0
        %1166 = vmatprep.subr.mxu0 0.0
        %1167 = vmatpush1.msra.mxu0 0.0
        %1168 = vmatprep.subr.mxu0 0.0
        %1169 = vmatpush1.msra.mxu0 0.0
        %1170 = vmatprep.subr.mxu0 0.0
        %1171 = vmatpush1.msra.mxu0 0.0
        %1172 = vmatprep.subr.mxu0 0.0
        %1173 = vmatpush1.msra.mxu0 0.0
        %1174 = vmatprep.subr.mxu0 0.0
        %1175 = vmatpush1.msra.mxu0 0.0
        %1176 = vmatprep.subr.mxu0 0.0
        %1177 = vmatpush1.msra.mxu0 0.0
        %1178 = vmatprep.subr.mxu0 0.0
        %1179 = vmatpush1.msra.mxu0 0.0
        %1180 = vmatprep.subr.mxu0 0.0
        %1181 = vmatpush1.msra.mxu0 0.0
        %1182 = vmatprep.subr.mxu0 0.0
        %1183 = vmatpush1.msra.mxu0 0.0
        %1184 = vmatprep.subr.mxu0 0.0
        %1185 = vmatpush1.msra.mxu0 0.0
        %1186 = vmatprep.subr.mxu0 0.0
        %1187 = vmatpush1.msra.mxu0 0.0
        %1188 = vmatprep.subr.mxu0 0.0
        %1189 = vmatpush1.msra.mxu0 0.0
        %1190 = vmatprep.subr.mxu0 0.0
        %1191 = vmatpush1.msra.mxu0 0.0
        %1192 = vmatprep.subr.mxu0 0.0
        %1193 = vmatpush1.msra.mxu0 0.0
        %1194 = vmatprep.subr.mxu0 0.0
        %1195 = vmatpush1.msra.mxu0 0.0
        %1196 = vmatprep.subr.mxu0 0.0
        %1197 = vmatpush1.msra.mxu0 0.0
        %1198 = vmatprep.subr.mxu0 0.0
        %1199 = vmatpush1.msra.mxu0 0.0
        %1200 = vmatprep.subr.mxu0 0.0
        %1201 = vmatpush1.msra.mxu0 0.0
        %1202 = vmatprep.subr.mxu0 0.0
        %1203 = vmatpush1.msra.mxu0 0.0
        %1204 = vmatprep.subr.mxu0 0.0
        %1205 = vmatpush1.msra.mxu0 0.0
        %1206 = vmatprep.subr.mxu0 0.0
        %1207 = vmatpush1.msra.mxu0 0.0
        %1208 = vmatprep.subr.mxu0 0.0
        %1209 = vmatpush1.msra.mxu0 0.0
        %1210 = vmatprep.subr.mxu0 0.0
        %1211 = vmatpush1.msra.mxu0 0.0
        %1212 = vmatprep.subr.mxu0 0.0
        %1213 = vmatpush1.msra.mxu0 0.0
        %1214 = vmatprep.subr.mxu0 0.0
        %1215 = vmatpush1.msra.mxu0 0.0
        %1216 = vmatprep.subr.mxu0 0.0
        %1217 = vmatpush1.msra.mxu0 0.0
        %1218 = vmatprep.subr.mxu0 0.0
        %1219 = vmatpush1.msra.mxu0 0.0
        %1220 = vmatprep.subr.mxu0 0.0
        %1221 = vmatpush1.msra.mxu0 0.0
        %1222 = vmatprep.subr.mxu0 0.0
        %1223 = vmatpush1.msra.mxu0 0.0
        %1224 = vmatprep.subr.mxu0 0.0
        %1225 = vmatpush1.msra.mxu0 0.0
        %1226 = vmatprep.mubr.f32.mxu0 0.0
        %1227 = vmatmul.mubr.f32.gmra.mrb[0].mxu0 %v1115
        %v1228 = vpop.f32.mrb[0].mxu0
        %v1229 = vadd.f32 0.0, %v1228
        %v1230 = vpop.f32.mrb[0].mxu0
        %1231 = vmatprep.mubr.f32.mxu0 0.0
        %1232 = vmatmul.mubr.f32.gmra.mrb[0].mxu0 %v1118
        %v1233 = vpop.f32.mrb[0].mxu0
        %v1234 = vadd.f32 0.0, %v1233
        %v1235 = vpop.f32.mrb[0].mxu0
        %1236 = vmatprep.mubr.f32.mxu0 0.0
        %1237 = vmatmul.mubr.f32.gmra.mrb[0].mxu0 %v1121
        %v1238 = vpop.f32.mrb[0].mxu0
        %v1239 = vadd.f32 0.0, %v1238
        %v1240 = vpop.f32.mrb[0].mxu0
        %1241 = vmatprep.mubr.f32.mxu0 0.0
        %1242 = vmatmul.mubr.f32.gmra.mrb[0].mxu0 %v1124
        %v1243 = vpop.f32.mrb[0].mxu0
        %v1244 = vadd.f32 0.0, %v1243
        %v1245 = vpop.f32.mrb[0].mxu0
        %1246 = vmatprep.mubr.f32.mxu0 0.0
        %1247 = vmatmul.mubr.f32.gmra.mrb[0].mxu0 %v1127
        %v1248 = vpop.f32.mrb[0].mxu0
        %v1249 = vadd.f32 0.0, %v1248
        %v1250 = vpop.f32.mrb[0].mxu0
        %1251 = vmatprep.mubr.f32.mxu0 0.0
        %1252 = vmatmul.mubr.f32.gmra.mrb[0].mxu0 %v1130
        %v1253 = vpop.f32.mrb[0].mxu0
        %v1254 = vadd.f32 0.0, %v1253
        %v1255 = vpop.f32.mrb[0].mxu0
        %1256 = vmatprep.mubr.f32.mxu0 0.0
        %1257 = vmatmul.mubr.f32.gmra.mrb[0].mxu0 %v1133
        %v1258 = vpop.f32.mrb[0].mxu0
        %v1259 = vadd.f32 0.0, %v1258
        %v1260 = vpop.f32.mrb[0].mxu0
        %1261 = vmatprep.mubr.f32.mxu0 0.0
        %1262 = vmatmul.mubr.f32.gmra.mrb[0].mxu0 %v1136
        %v1263 = vpop.f32.mrb[0].mxu0
        %v1264 = vadd.f32 0.0, %v1263
        %v1265 = vpop.f32.mrb[0].mxu0
        %1266 = vmatprep.mubr.f32.mxu0 0.0
        %1267 = vmatmul.mubr.f32.gmra.mrb[0].mxu0 %v1139
        %v1268 = vpop.f32.mrb[0].mxu0
        %v1269 = vadd.f32 0.0, %v1268
        %v1270 = vpop.f32.mrb[0].mxu0
        %1271 = vmatprep.mubr.f32.mxu0 0.0
        %1272 = vmatmul.mubr.f32.gmra.mrb[0].mxu0 %v1142
        %v1273 = vpop.f32.mrb[0].mxu0
        %v1274 = vadd.f32 0.0, %v1273
        %v1275 = vpop.f32.mrb[0].mxu0
        %1276 = vmatprep.mubr.f32.mxu0 0.0
        %1277 = vmatmul.mubr.f32.gmra.mrb[0].mxu0 %v1145
        %v1278 = vpop.f32.mrb[0].mxu0
        %v1279 = vadd.f32 0.0, %v1278
        %v1280 = vpop.f32.mrb[0].mxu0
        %1281 = vmatprep.mubr.f32.mxu0 0.0
        %1282 = vmatmul.mubr.f32.gmra.mrb[0].mxu0 %v1148
        %v1283 = vpop.f32.mrb[0].mxu0
        %v1284 = vadd.f32 0.0, %v1283
        %v1285 = vpop.f32.mrb[0].mxu0
        %1286 = vmatprep.mubr.f32.mxu0 0.0
        %1287 = vmatmul.mubr.f32.gmra.mrb[0].mxu0 %v1151
        %v1288 = vpop.f32.mrb[0].mxu0
        %v1289 = vadd.f32 0.0, %v1288
        %v1290 = vpop.f32.mrb[0].mxu0
        %1291 = vmatprep.mubr.f32.mxu0 0.0
        %1292 = vmatmul.mubr.f32.gmra.mrb[0].mxu0 %v1154
        %v1293 = vpop.f32.mrb[0].mxu0
        %v1294 = vadd.f32 0.0, %v1293
        %v1295 = vpop.f32.mrb[0].mxu0
        %1296 = vmatprep.mubr.f32.mxu0 0.0
        %1297 = vmatmul.mubr.f32.gmra.mrb[0].mxu0 %v1157
        %v1298 = vpop.f32.mrb[0].mxu0
        %v1299 = vadd.f32 0.0, %v1298
        %v1300 = vpop.f32.mrb[0].mxu0
        %1301 = vmatprep.mubr.f32.mxu0 0.0
        %1302 = vmatmul.mubr.f32.gmra.mrb[0].mxu0 %v1160
        %v1303 = vpop.f32.mrb[0].mxu0
        %v1304 = vadd.f32 0.0, %v1303
        %v1305 = vpop.f32.mrb[0].mxu0
        %1306 = vdwg.mxu0
        %v1307 = vmul.f32 %v437, %v1229
        %v1308 = vmul.f32 %v442, %v1234
        %v1309 = vmul.f32 %v447, %v1239
        %v1310 = vmul.f32 %v452, %v1244
        %v1311 = vmul.f32 %v457, %v1249
        %v1312 = vmul.f32 %v462, %v1254
        %v1313 = vmul.f32 %v467, %v1259
        %v1314 = vmul.f32 %v472, %v1264
        %v1315 = vadd.f32 %v1307, %v1269
        %v1316 = vadd.f32 %v1308, %v1274
        %v1317 = vadd.f32 %v1309, %v1279
        %v1318 = vadd.f32 %v1310, %v1284
        %v1319 = vadd.f32 %v1311, %v1289
        %v1320 = vadd.f32 %v1312, %v1294
        %v1321 = vadd.f32 %v1313, %v1299
        %v1322 = vadd.f32 %v1314, %v1304
        %v1323 = vmax.f32 %v1315, 0.0
        %v1324 = vmax.f32 %v1316, 0.0
        %v1325 = vmax.f32 %v1317, 0.0
        %v1326 = vmax.f32 %v1318, 0.0
        %v1327 = vmax.f32 %v1319, 0.0
        %v1328 = vmax.f32 %v1320, 0.0
        %v1329 = vmax.f32 %v1321, 0.0
        %v1330 = vmax.f32 %v1322, 0.0
        %1331 = vst [vmem:[%s330] sm:$0xff] %v1323
        %1332 = vst [vmem:[%s330 + $0x8] sm:$0xff] %v1324
        %1333 = vst [vmem:[%s330 + $0x10] sm:$0xff] %v1325
        %1334 = vst [vmem:[%s330 + $0x18] sm:$0xff] %v1326
        %1335 = vst [vmem:[%s330 + $0x20] sm:$0xff] %v1327
        %1336 = vst [vmem:[%s330 + $0x28] sm:$0xff] %v1328
        %1337 = vst [vmem:[%s330 + $0x30] sm:$0xff] %v1329
        %1338 = vst [vmem:[%s330 + $0x38] sm:$0xff] %v1330
        %s1339 = sand.u32 %s181, 1
        %s1340 = scalar_lea.sflag [#allocation4], %s1339
        %s1341 = sand.u32 %s181, 1
        %s1342 = smul.addr %s1341, 64
        %s1343 = scalar_lea.vmem [#allocation3], %s1342
        // Predicated region
        $region87: #{tpu_custom_call.1} parent=81 // pred_check
          %p1344 = pneg %p191
        $region88: #{tpu_custom_call.1} parent=81 // pred_check_branch
          %1346 = sbr.rel (%p1344) target = $region90
        $region89: #{tpu_custom_call.1} parent=81 // pred_region
          %s1348 = ssub.s32 1024, 1024
          %1349 = vsyncadd %s1340, %s1348
          %s1350 = smul.addr %s21, 128
          %s1351 = scalar_lea.hbm %s7, %s1350
          %s1352 = sshll.u32 %s1343, 4
          %s1353 = int_to_ptr.vmem [resolvable:$true] %s1352
          %1358 = dma.vmem_to_hbm [thread:$0]  %s1353, 1024, %s1351, %s1340, 128, 256, 8
        $region90: #{tpu_custom_call.1} parent=81 // pred_fallthru
          _
      $region82: #{tpu_custom_call.1} parent=5 // pred_fallthru
        _
      %p1359 = scmp.le.s32.totalorder 2, %s16
      // Predicated region
      $region91: #{tpu_custom_call.1} parent=5 // pred_check
        %p1360 = pneg %p1359
      $region92: #{tpu_custom_call.1} parent=5 // pred_check_branch
        %1362 = sbr.rel (%p1360) target = $region94
      $region93: #{tpu_custom_call.1} parent=5 // pred_region
        %s1363 = ssub.s32 %s16, 2
        // Predicated region
        $region95: #{tpu_custom_call.1} parent=93 // pred_check
          %p1364 = pneg %p197
        $region96: #{tpu_custom_call.1} parent=93 // pred_check_branch
          %1366 = sbr.rel (%p1364) target = $region98
        $region97: #{tpu_custom_call.1} parent=93 // pred_region
          %s1367 = sand.u32 %s182, 1
          %s1368 = scalar_lea.sflag [#allocation4], %s1367
          %s1369 = sand.u32 %s182, 1
          %s1370 = smul.addr %s1369, 64
          %s1371 = scalar_lea.vmem [#allocation3], %s1370
          %1372 = dma.done %s1368, 1024
        $region98: #{tpu_custom_call.1} parent=93 // pred_fallthru
          _
      $region94: #{tpu_custom_call.1} parent=5 // pred_fallthru
        _
    $region6: #{tpu_custom_call.1} parent=1 // loop_footer
      %s20 = sadd.s32 1, %s16
    $region7: #{tpu_custom_call.1} parent=1 // loop_footer_branch
      %15 = sbr.rel target = $region3
    $region8: #{tpu_custom_call.1} parent=1 // loop_exit
      _
    %1373 = vsyncpa [#allocation4], 1
    %s1374 = scalar_lea.sflag [#allocation4], 1
    %1375 = vsyncpa %s1374, 1

</llo_original>
